<compile_context>
chip_gen: v7x
topology: tpu7x:2x2x1
jax: 0.10.0
libtpu: 0.0.40
codegen_flags: <defaults>
</compile_context>

<pallas_src>
import functools

import jax
import jax.numpy as jnp
from jax.experimental import pallas as pl
from jax.experimental.pallas import tpu as pltpu


# ----------------------------------------------------------------------------
# Fused Pallas kernel: depthwise conv + 1x1 conv + BN(affine) + Hardswish
# ----------------------------------------------------------------------------

def _dwc_patch_embed_kernel(x_ref, dw_ref, pw_ref, scale_ref, shift_ref,
                            o_ref, xpad_ref, *, K, p, H, W):
    """One batch element, NHWC layout.

    x_ref    : (1, H, W, C)       unpadded input                (f32)
    dw_ref   : (K*K, 1, C)        depthwise taps, channel-last  (f32)
    pw_ref   : (C, C)             1x1 conv weight (Cin, Cout)   (bf16)
    scale_ref: (1, C)             folded BN scale               (f32)
    shift_ref: (1, C)             folded BN shift               (f32)
    o_ref    : (1, H1, W1, C)     NHWC output
    xpad_ref : (H+2p, W+2p, C)    VMEM scratch holding the zero halo
    """
    C = o_ref.shape[-1]
    H1 = H + 2 * p - K + 1          # stride-1 conv output size
    W1 = W + 2 * p - K + 1

    # --- in-kernel halo: zero the scratch, write the interior ---------------
    # (avoids a wrapper-side jnp.pad -> no extra HBM copy of the input)
    xpad_ref[...] = jnp.zeros_like(xpad_ref)
    xpad_ref[p:p + H, p:p + W, :] = x_ref[0]

    # --- depthwise KxK (stride 1): lane-dense VPU multiply-adds, f32 acc ----
    acc = jnp.zeros((H1, W1, C), jnp.float32)
    for dy in range(K):
        for dx in range(K):
            tap = xpad_ref[dy:dy + H1, dx:dx + W1, :]
            acc = acc + tap * dw_ref[dy * K + dx]        # (1, C) broadcast

    # --- pointwise 1x1 conv as ONE (H1*W1, C) @ (C, C) MXU matmul -----------
    # bf16 operands, f32 accumulation (keep the MXU off the slow f32 path).
    y = jnp.dot(acc.reshape(H1 * W1, C).astype(jnp.bfloat16), pw_ref[...],
                preferred_element_type=jnp.float32)

    # --- BatchNorm (inference, folded) + Hardswish, fused in-register -------
    y = y * scale_ref[...] + shift_ref[...]
    y = y * jnp.clip(y + 3.0, 0.0, 6.0) * (1.0 / 6.0)

    o_ref[0] = y.reshape(H1, W1, C).astype(o_ref.dtype)


# ----------------------------------------------------------------------------
# Wrapper
# ----------------------------------------------------------------------------

def dwc_patch_embed(x_nchw, params, *, kernel_size=3, stride=1, eps=1e-5):
    """DWCPatchEmbed forward. x_nchw: (B, C, H, W) -> (B, C, H', W')."""
    B, C, H, W = x_nchw.shape
    K = kernel_size
    p = (K - 1) // 2                     # same padding as the torch module
    H1 = H + 2 * p - K + 1               # stride-1 conv output size
    W1 = W + 2 * p - K + 1

    # ---- one-time parameter re-layouts (outside the kernel) ----
    dw_w = params["dw_w"]                # torch layout (C, 1, K, K)
    pw_w = params["pw_w"]                # torch layout (C, C, 1, 1)
    dw_mat = dw_w.reshape(C, K * K).T.reshape(K * K, 1, C).astype(jnp.float32)
    pw_mat = pw_w[:, :, 0, 0].T.astype(jnp.bfloat16)          # (Cin, Cout)
    inv_std = jax.lax.rsqrt(params["bn_var"] + eps)
    scale = (params["bn_gamma"] * inv_std).reshape(1, C).astype(jnp.float32)
    shift = (params["bn_beta"]
             - params["bn_mean"] * params["bn_gamma"] * inv_std
             ).reshape(1, C).astype(jnp.float32)

    # ---- NCHW -> NHWC (lane-dense channels) --------------------------------
    x_nhwc = jnp.transpose(x_nchw, (0, 2, 3, 1))

    kernel = functools.partial(_dwc_patch_embed_kernel, K=K, p=p, H=H, W=W)
    out_nhwc = pl.pallas_call(
        kernel,
        out_shape=jax.ShapeDtypeStruct((B, H1, W1, C), x_nchw.dtype),
        grid=(B,),
        in_specs=[
            pl.BlockSpec((1, H, W, C), lambda b: (b, 0, 0, 0)),
            pl.BlockSpec((K * K, 1, C), lambda b: (0, 0, 0)),
            pl.BlockSpec((C, C), lambda b: (0, 0)),
            pl.BlockSpec((1, C), lambda b: (0, 0)),
            pl.BlockSpec((1, C), lambda b: (0, 0)),
        ],
        out_specs=pl.BlockSpec((1, H1, W1, C), lambda b: (b, 0, 0, 0)),
        scratch_shapes=[pltpu.VMEM((H + 2 * p, W + 2 * p, C), jnp.float32)],
        compiler_params=pltpu.CompilerParams(
            dimension_semantics=("parallel",)),   # shard batches over v7x TCs
    )(x_nhwc, dw_mat, pw_mat, scale, shift)

    if stride > 1:
        # stride-s conv output == stride-1 output subsampled; the pointwise
        # ops (1x1 conv / BN / Hardswish) commute with the subsample.
        # TODO(synk): dedicated strided kernel to skip redundant rows/cols.
        out_nhwc = out_nhwc[:, ::stride, ::stride, :]

    return jnp.transpose(out_nhwc, (0, 3, 1, 2))


# ----------------------------------------------------------------------------
# Pure-JAX reference (inference-mode BN) for a tolerance check
# ----------------------------------------------------------------------------

def _ref_forward(x, dw_w, pw_w, gamma, beta, mean, var, *, K, stride, eps):
    C = x.shape[1]
    p = (K - 1) // 2
    y = jax.lax.conv_general_dilated(
        x, dw_w, window_strides=(stride, stride), padding=((p, p), (p, p)),
        dimension_numbers=("NCHW", "OIHW", "NCHW"), feature_group_count=C)
    y = jax.lax.conv_general_dilated(
        y, pw_w, window_strides=(1, 1), padding=((0, 0), (0, 0)),
        dimension_numbers=("NCHW", "OIHW", "NCHW"))
    scale = gamma / jnp.sqrt(var + eps)
    shift = beta - mean * scale
    y = y * scale[None, :, None, None] + shift[None, :, None, None]
    return y * jnp.clip(y + 3.0, 0.0, 6.0) / 6.0


# ----------------------------------------------------------------------------
# Main
# ----------------------------------------------------------------------------

if __name__ == "__main__":
    # DWCPatchEmbed is used with in_chans == embed_dim (true depthwise),
    # kernel_size=3, stride=1 in practice; channels=128 keeps lanes dense.
    B, C, H, W = 2, 128, 16, 16
    K, STRIDE, EPS = 3, 1, 1e-5

    key = jax.random.PRNGKey(0)
    kx, k1, k2, k3, k4, k5, k6 = jax.random.split(key, 7)
    x = jax.random.normal(kx, (B, C, H, W), jnp.float32)
    params = {
        # conv inits follow the torch module: N(0, sqrt(2 / (k*k*out_ch)))
        "dw_w": jnp.sqrt(2.0 / (K * K * C)) *
                jax.random.normal(k1, (C, 1, K, K), jnp.float32),
        "pw_w": jnp.sqrt(2.0 / C) *
                jax.random.normal(k2, (C, C, 1, 1), jnp.float32),
        # non-trivial BN stats so the folded scale/shift path is exercised
        "bn_gamma": 1.0 + 0.1 * jax.random.normal(k3, (C,), jnp.float32),
        "bn_beta": 0.1 * jax.random.normal(k4, (C,), jnp.float32),
        "bn_mean": 0.1 * jax.random.normal(k5, (C,), jnp.float32),
        "bn_var": jax.random.uniform(k6, (C,), jnp.float32, 0.5, 1.5),
    }

    fwd = jax.jit(functools.partial(dwc_patch_embed,
                                    kernel_size=K, stride=STRIDE, eps=EPS))
    out = jax.block_until_ready(fwd(x, params))
    assert out.shape == (B, C, H, W), out.shape
    assert bool(jnp.all(jnp.isfinite(out)))

    # TODO(synk): BatchNorm is implemented in inference mode (running stats);
    # training-mode batch statistics are not computed in-kernel.
    ref = _ref_forward(x, params["dw_w"], params["pw_w"], params["bn_gamma"],
                       params["bn_beta"], params["bn_mean"], params["bn_var"],
                       K=K, stride=STRIDE, eps=EPS)
    assert bool(jnp.allclose(out, ref, atol=5e-2, rtol=5e-2)), \
        float(jnp.max(jnp.abs(out - ref)))

    print("KERNEL_OK")
</pallas_src>

<mosaic_0001>
module attributes {stable_mosaic.version = 11 : i64} {
  func.func @_dwc_patch_embed_kernel(%arg0: i32, %arg1: memref<1x16x16x128xf32, #tpu.memory_space<vmem>>, %arg2: memref<9x1x128xf32, #tpu.memory_space<vmem>>, %arg3: memref<128x128xbf16, #tpu.memory_space<vmem>>, %arg4: memref<1x128xf32, #tpu.memory_space<vmem>>, %arg5: memref<1x128xf32, #tpu.memory_space<vmem>>, %arg6: memref<1x16x16x128xf32, #tpu.memory_space<vmem>>, %arg7: memref<18x18x128xf32, #tpu.memory_space<vmem>>) attributes {dimension_semantics = [#tpu.dimension_semantics<parallel>], iteration_bounds = array<i64: 2>, scalar_prefetch = 0 : i64, scratch_operands = 1 : i64, tpu.core_type = #tpu.core_type<tc>, window_params = [{transform_indices = @transform_0, window_bounds = array<i64: 1, 16, 16, 128>}, {pipeline_mode = #tpu.pipeline_mode<synchronous>, transform_indices = @transform_1, window_bounds = array<i64: 9, 1, 128>}, {pipeline_mode = #tpu.pipeline_mode<synchronous>, transform_indices = @transform_2, window_bounds = array<i64: 128, 128>}, {pipeline_mode = #tpu.pipeline_mode<synchronous>, transform_indices = @transform_3, window_bounds = array<i64: 1, 128>}, {pipeline_mode = #tpu.pipeline_mode<synchronous>, transform_indices = @transform_4, window_bounds = array<i64: 1, 128>}, {transform_indices = @transform_5, window_bounds = array<i64: 1, 16, 16, 128>}]} {
    %cst = arith.constant 0.000000e+00 : f32
    %0 = vector.broadcast %cst : f32 to vector<18x18x128xf32>
    %c0 = arith.constant 0 : index
    %c0_0 = arith.constant 0 : index
    %c0_1 = arith.constant 0 : index
    %1 = vector.load %arg7[%c0, %c0_0, %c0_1] : memref<18x18x128xf32, #tpu.memory_space<vmem>>, vector<18x18x128xf32>
    tpu.vector_store %arg7[%c0, %c0_0, %c0_1], %0 {strides = array<i32>} : memref<18x18x128xf32, #tpu.memory_space<vmem>>, vector<18x18x128xf32>,
    %c0_2 = arith.constant 0 : index
    %c0_3 = arith.constant 0 : index
    %c0_4 = arith.constant 0 : index
    %c0_5 = arith.constant 0 : index
    %2 = vector.load %arg1[%c0_2, %c0_3, %c0_4, %c0_5] : memref<1x16x16x128xf32, #tpu.memory_space<vmem>>, vector<1x16x16x128xf32>
    %3 = vector.shape_cast %2 : vector<1x16x16x128xf32> to vector<16x16x128xf32>
    %c1 = arith.constant 1 : index
    %c1_6 = arith.constant 1 : index
    %c0_7 = arith.constant 0 : index
    %4 = vector.load %arg7[%c1, %c1_6, %c0_7] : memref<18x18x128xf32, #tpu.memory_space<vmem>>, vector<16x16x128xf32>
    tpu.vector_store %arg7[%c1, %c1_6, %c0_7], %3 {strides = array<i32>} : memref<18x18x128xf32, #tpu.memory_space<vmem>>, vector<16x16x128xf32>,
    %cst_8 = arith.constant 0.000000e+00 : f32
    %5 = vector.broadcast %cst_8 : f32 to vector<16x16x128xf32>
    %c0_9 = arith.constant 0 : index
    %c0_10 = arith.constant 0 : index
    %c0_11 = arith.constant 0 : index
    %6 = vector.load %arg7[%c0_9, %c0_10, %c0_11] : memref<18x18x128xf32, #tpu.memory_space<vmem>>, vector<16x16x128xf32>
    %c0_12 = arith.constant 0 : index
    %c0_13 = arith.constant 0 : index
    %c0_14 = arith.constant 0 : index
    %7 = vector.load %arg2[%c0_12, %c0_13, %c0_14] : memref<9x1x128xf32, #tpu.memory_space<vmem>>, vector<1x1x128xf32>
    %8 = vector.shape_cast %7 : vector<1x1x128xf32> to vector<1x128xf32>
    %9 = vector.shape_cast %8 : vector<1x128xf32> to vector<1x1x128xf32>
    %10 = vector.broadcast %9 : vector<1x1x128xf32> to vector<16x16x128xf32>
    %11 = arith.mulf %6, %10 : vector<16x16x128xf32>
    %12 = arith.addf %5, %11 : vector<16x16x128xf32>
    %c0_15 = arith.constant 0 : index
    %c1_16 = arith.constant 1 : index
    %c0_17 = arith.constant 0 : index
    %13 = vector.load %arg7[%c0_15, %c1_16, %c0_17] : memref<18x18x128xf32, #tpu.memory_space<vmem>>, vector<16x16x128xf32>
    %c1_18 = arith.constant 1 : index
    %c0_19 = arith.constant 0 : index
    %c0_20 = arith.constant 0 : index
    %14 = vector.load %arg2[%c1_18, %c0_19, %c0_20] : memref<9x1x128xf32, #tpu.memory_space<vmem>>, vector<1x1x128xf32>
    %15 = vector.shape_cast %14 : vector<1x1x128xf32> to vector<1x128xf32>
    %16 = vector.shape_cast %15 : vector<1x128xf32> to vector<1x1x128xf32>
    %17 = vector.broadcast %16 : vector<1x1x128xf32> to vector<16x16x128xf32>
    %18 = arith.mulf %13, %17 : vector<16x16x128xf32>
    %19 = arith.addf %12, %18 : vector<16x16x128xf32>
    %c0_21 = arith.constant 0 : index
    %c2 = arith.constant 2 : index
    %c0_22 = arith.constant 0 : index
    %20 = vector.load %arg7[%c0_21, %c2, %c0_22] : memref<18x18x128xf32, #tpu.memory_space<vmem>>, vector<16x16x128xf32>
    %c2_23 = arith.constant 2 : index
    %c0_24 = arith.constant 0 : index
    %c0_25 = arith.constant 0 : index
    %21 = vector.load %arg2[%c2_23, %c0_24, %c0_25] : memref<9x1x128xf32, #tpu.memory_space<vmem>>, vector<1x1x128xf32>
    %22 = vector.shape_cast %21 : vector<1x1x128xf32> to vector<1x128xf32>
    %23 = vector.shape_cast %22 : vector<1x128xf32> to vector<1x1x128xf32>
    %24 = vector.broadcast %23 : vector<1x1x128xf32> to vector<16x16x128xf32>
    %25 = arith.mulf %20, %24 : vector<16x16x128xf32>
    %26 = arith.addf %19, %25 : vector<16x16x128xf32>
    %c1_26 = arith.constant 1 : index
    %c0_27 = arith.constant 0 : index
    %c0_28 = arith.constant 0 : index
    %27 = vector.load %arg7[%c1_26, %c0_27, %c0_28] : memref<18x18x128xf32, #tpu.memory_space<vmem>>, vector<16x16x128xf32>
    %c3 = arith.constant 3 : index
    %c0_29 = arith.constant 0 : index
    %c0_30 = arith.constant 0 : index
    %28 = vector.load %arg2[%c3, %c0_29, %c0_30] : memref<9x1x128xf32, #tpu.memory_space<vmem>>, vector<1x1x128xf32>
    %29 = vector.shape_cast %28 : vector<1x1x128xf32> to vector<1x128xf32>
    %30 = vector.shape_cast %29 : vector<1x128xf32> to vector<1x1x128xf32>
    %31 = vector.broadcast %30 : vector<1x1x128xf32> to vector<16x16x128xf32>
    %32 = arith.mulf %27, %31 : vector<16x16x128xf32>
    %33 = arith.addf %26, %32 : vector<16x16x128xf32>
    %c1_31 = arith.constant 1 : index
    %c1_32 = arith.constant 1 : index
    %c0_33 = arith.constant 0 : index
    %34 = vector.load %arg7[%c1_31, %c1_32, %c0_33] : memref<18x18x128xf32, #tpu.memory_space<vmem>>, vector<16x16x128xf32>
    %c4 = arith.constant 4 : index
    %c0_34 = arith.constant 0 : index
    %c0_35 = arith.constant 0 : index
    %35 = vector.load %arg2[%c4, %c0_34, %c0_35] : memref<9x1x128xf32, #tpu.memory_space<vmem>>, vector<1x1x128xf32>
    %36 = vector.shape_cast %35 : vector<1x1x128xf32> to vector<1x128xf32>
    %37 = vector.shape_cast %36 : vector<1x128xf32> to vector<1x1x128xf32>
    %38 = vector.broadcast %37 : vector<1x1x128xf32> to vector<16x16x128xf32>
    %39 = arith.mulf %34, %38 : vector<16x16x128xf32>
    %40 = arith.addf %33, %39 : vector<16x16x128xf32>
    %c1_36 = arith.constant 1 : index
    %c2_37 = arith.constant 2 : index
    %c0_38 = arith.constant 0 : index
    %41 = vector.load %arg7[%c1_36, %c2_37, %c0_38] : memref<18x18x128xf32, #tpu.memory_space<vmem>>, vector<16x16x128xf32>
    %c5 = arith.constant 5 : index
    %c0_39 = arith.constant 0 : index
    %c0_40 = arith.constant 0 : index
    %42 = vector.load %arg2[%c5, %c0_39, %c0_40] : memref<9x1x128xf32, #tpu.memory_space<vmem>>, vector<1x1x128xf32>
    %43 = vector.shape_cast %42 : vector<1x1x128xf32> to vector<1x128xf32>
    %44 = vector.shape_cast %43 : vector<1x128xf32> to vector<1x1x128xf32>
    %45 = vector.broadcast %44 : vector<1x1x128xf32> to vector<16x16x128xf32>
    %46 = arith.mulf %41, %45 : vector<16x16x128xf32>
    %47 = arith.addf %40, %46 : vector<16x16x128xf32>
    %c2_41 = arith.constant 2 : index
    %c0_42 = arith.constant 0 : index
    %c0_43 = arith.constant 0 : index
    %48 = vector.load %arg7[%c2_41, %c0_42, %c0_43] : memref<18x18x128xf32, #tpu.memory_space<vmem>>, vector<16x16x128xf32>
    %c6 = arith.constant 6 : index
    %c0_44 = arith.constant 0 : index
    %c0_45 = arith.constant 0 : index
    %49 = vector.load %arg2[%c6, %c0_44, %c0_45] : memref<9x1x128xf32, #tpu.memory_space<vmem>>, vector<1x1x128xf32>
    %50 = vector.shape_cast %49 : vector<1x1x128xf32> to vector<1x128xf32>
    %51 = vector.shape_cast %50 : vector<1x128xf32> to vector<1x1x128xf32>
    %52 = vector.broadcast %51 : vector<1x1x128xf32> to vector<16x16x128xf32>
    %53 = arith.mulf %48, %52 : vector<16x16x128xf32>
    %54 = arith.addf %47, %53 : vector<16x16x128xf32>
    %c2_46 = arith.constant 2 : index
    %c1_47 = arith.constant 1 : index
    %c0_48 = arith.constant 0 : index
    %55 = vector.load %arg7[%c2_46, %c1_47, %c0_48] : memref<18x18x128xf32, #tpu.memory_space<vmem>>, vector<16x16x128xf32>
    %c7 = arith.constant 7 : index
    %c0_49 = arith.constant 0 : index
    %c0_50 = arith.constant 0 : index
    %56 = vector.load %arg2[%c7, %c0_49, %c0_50] : memref<9x1x128xf32, #tpu.memory_space<vmem>>, vector<1x1x128xf32>
    %57 = vector.shape_cast %56 : vector<1x1x128xf32> to vector<1x128xf32>
    %58 = vector.shape_cast %57 : vector<1x128xf32> to vector<1x1x128xf32>
    %59 = vector.broadcast %58 : vector<1x1x128xf32> to vector<16x16x128xf32>
    %60 = arith.mulf %55, %59 : vector<16x16x128xf32>
    %61 = arith.addf %54, %60 : vector<16x16x128xf32>
    %c2_51 = arith.constant 2 : index
    %c2_52 = arith.constant 2 : index
    %c0_53 = arith.constant 0 : index
    %62 = vector.load %arg7[%c2_51, %c2_52, %c0_53] : memref<18x18x128xf32, #tpu.memory_space<vmem>>, vector<16x16x128xf32>
    %c8 = arith.constant 8 : index
    %c0_54 = arith.constant 0 : index
    %c0_55 = arith.constant 0 : index
    %63 = vector.load %arg2[%c8, %c0_54, %c0_55] : memref<9x1x128xf32, #tpu.memory_space<vmem>>, vector<1x1x128xf32>
    %64 = vector.shape_cast %63 : vector<1x1x128xf32> to vector<1x128xf32>
    %65 = vector.shape_cast %64 : vector<1x128xf32> to vector<1x1x128xf32>
    %66 = vector.broadcast %65 : vector<1x1x128xf32> to vector<16x16x128xf32>
    %67 = arith.mulf %62, %66 : vector<16x16x128xf32>
    %68 = arith.addf %61, %67 : vector<16x16x128xf32>
    %69 = vector.shape_cast %68 : vector<16x16x128xf32> to vector<256x128xf32>
    %70 = arith.truncf %69 : vector<256x128xf32> to vector<256x128xbf16>
    %c0_56 = arith.constant 0 : index
    %c0_57 = arith.constant 0 : index
    %71 = vector.load %arg3[%c0_56, %c0_57] : memref<128x128xbf16, #tpu.memory_space<vmem>>, vector<128x128xbf16>
    %cst_58 = arith.constant dense<0.000000e+00> : vector<256x128xf32>
    %72 = tpu.matmul %70, %71, %cst_58 {dimension_numbers = #tpu.dot_dimension_numbers<[1], [0], [0], [1], [0, 0, 1, 1], [], []>} : vector<256x128xbf16>, vector<128x128xbf16>, vector<256x128xf32> -> vector<256x128xf32>
    %c0_59 = arith.constant 0 : index
    %c0_60 = arith.constant 0 : index
    %73 = vector.load %arg4[%c0_59, %c0_60] : memref<1x128xf32, #tpu.memory_space<vmem>>, vector<1x128xf32>
    %74 = vector.broadcast %73 : vector<1x128xf32> to vector<256x128xf32>
    %75 = arith.mulf %72, %74 : vector<256x128xf32>
    %c0_61 = arith.constant 0 : index
    %c0_62 = arith.constant 0 : index
    %76 = vector.load %arg5[%c0_61, %c0_62] : memref<1x128xf32, #tpu.memory_space<vmem>>, vector<1x128xf32>
    %77 = vector.broadcast %76 : vector<1x128xf32> to vector<256x128xf32>
    %78 = arith.addf %75, %77 : vector<256x128xf32>
    %cst_63 = arith.constant 3.000000e+00 : f32
    %79 = vector.broadcast %cst_63 : f32 to vector<256x128xf32>
    %80 = arith.addf %78, %79 : vector<256x128xf32>
    %cst_64 = arith.constant 0.000000e+00 : f32
    %cst_65 = arith.constant 6.000000e+00 : f32
    %81 = vector.broadcast %cst_64 : f32 to vector<256x128xf32>
    %82 = arith.maximumf %81, %80 : vector<256x128xf32>
    %83 = vector.broadcast %cst_65 : f32 to vector<256x128xf32>
    %84 = arith.minimumf %83, %82 : vector<256x128xf32>
    %85 = arith.mulf %78, %84 : vector<256x128xf32>
    %cst_66 = arith.constant 0.166666672 : f32
    %86 = vector.broadcast %cst_66 : f32 to vector<256x128xf32>
    %87 = arith.mulf %85, %86 : vector<256x128xf32>
    %88 = vector.shape_cast %87 : vector<256x128xf32> to vector<16x16x128xf32>
    %c0_67 = arith.constant 0 : index
    %c0_68 = arith.constant 0 : index
    %c0_69 = arith.constant 0 : index
    %c0_70 = arith.constant 0 : index
    %89 = vector.load %arg6[%c0_67, %c0_68, %c0_69, %c0_70] : memref<1x16x16x128xf32, #tpu.memory_space<vmem>>, vector<1x16x16x128xf32>
    %90 = vector.shape_cast %89 : vector<1x16x16x128xf32> to vector<16x16x128xf32>
    %91 = vector.shape_cast %88 : vector<16x16x128xf32> to vector<1x16x16x128xf32>
    tpu.vector_store %arg6[%c0_67, %c0_68, %c0_69, %c0_70], %91 {strides = array<i32>} : memref<1x16x16x128xf32, #tpu.memory_space<vmem>>, vector<1x16x16x128xf32>,
    return
  }
  func.func @transform_0(%arg0: i32) -> (i32, i32, i32, i32) {
    %c0_i32 = arith.constant 0 : i32
    %c0_i32_0 = arith.constant 0 : i32
    %c0_i32_1 = arith.constant 0 : i32
    %c0_i32_2 = arith.constant 0 : i32
    return %arg0, %c0_i32, %c0_i32_0, %c0_i32_1 : i32, i32, i32, i32
  }
  func.func @transform_1(%arg0: i32) -> (i32, i32, i32) {
    %c0_i32 = arith.constant 0 : i32
    %c0_i32_0 = arith.constant 0 : i32
    %c0_i32_1 = arith.constant 0 : i32
    %c0_i32_2 = arith.constant 0 : i32
    return %c0_i32, %c0_i32_0, %c0_i32_1 : i32, i32, i32
  }
  func.func @transform_2(%arg0: i32) -> (i32, i32) {
    %c0_i32 = arith.constant 0 : i32
    %c0_i32_0 = arith.constant 0 : i32
    %c0_i32_1 = arith.constant 0 : i32
    return %c0_i32, %c0_i32_0 : i32, i32
  }
  func.func @transform_3(%arg0: i32) -> (i32, i32) {
    %c0_i32 = arith.constant 0 : i32
    %c0_i32_0 = arith.constant 0 : i32
    %c0_i32_1 = arith.constant 0 : i32
    return %c0_i32, %c0_i32_0 : i32, i32
  }
  func.func @transform_4(%arg0: i32) -> (i32, i32) {
    %c0_i32 = arith.constant 0 : i32
    %c0_i32_0 = arith.constant 0 : i32
    %c0_i32_1 = arith.constant 0 : i32
    return %c0_i32, %c0_i32_0 : i32, i32
  }
  func.func @transform_5(%arg0: i32) -> (i32, i32, i32, i32) {
    %c0_i32 = arith.constant 0 : i32
    %c0_i32_0 = arith.constant 0 : i32
    %c0_i32_1 = arith.constant 0 : i32
    %c0_i32_2 = arith.constant 0 : i32
    return %arg0, %c0_i32, %c0_i32_0, %c0_i32_1 : i32, i32, i32, i32
  }
}

</mosaic_0001>

<llo_original>
// kernel: dwc_patch_embed.1
$region0: #{dwc_patch_embed.1}
  #allocation0 [shape = 'u32[]', space=smem, size = 0x4, offset = 0x4, fixed_abs, tag = 'smem constant byte address 0x4 - core index']
  #allocation1 [shape = 'u32[144,128]{1,0:T(1,128)}', space=vmem, size = 0x12000, scoped, tag = 'internal scratch']
  #allocation2 [shape = 'f32[18,18,128]{2,1,0:T(8,128)}', space=vmem, size = 0x36000, scoped, tag = 'scratch operand']
  %s0 = inlined_call_operand.hbm [shape: f32[2,16,16,128], index: 0, kind: input, shape index: {}]
  %s1 = inlined_call_operand.vmem [shape: f32[9,1,128], index: 1, kind: input, shape index: {}]
  %s2 = inlined_call_operand.vmem [shape: bf16[128,128], index: 2, kind: input, shape index: {}]
  %s3 = inlined_call_operand.vmem [shape: f32[1,128], index: 3, kind: input, shape index: {}]
  %s4 = inlined_call_operand.vmem [shape: f32[1,128], index: 4, kind: input, shape index: {}]
  %s5 = inlined_call_operand.hbm [shape: f32[2,16,16,128], index: 5, kind: output, shape index: {}]
  %s6 = sld [smem:[#allocation0]]
  $region57: #{dwc_patch_embed.1} parent=0
    _
  %s8 = ssub.s32 1, %s6
  %s9 = scalar_select 0, %s8, %s6
  $region1: #{dwc_patch_embed.1} parent=0
    #allocation3 [shape = 'u8[262144]{0}', space=vmem, size = 0x40000, scoped, tag = 'input window, operand 0']
    #allocation4 [shape = 's32[2]{0}', space=sflag, size = 0x8, scoped, tag = 'scoped memory for dwc_patch_embed.1']
    #allocation5 [shape = 's32[2]{0}', space=sflag, size = 0x8, scoped, tag = 'scoped memory for dwc_patch_embed.1']
    #allocation6 [shape = 'u8[262144]{0}', space=vmem, size = 0x40000, scoped, tag = 'output window, operand 0']
    %10 = vsyncpa [#allocation4], 0
    %s11 = scalar_lea.sflag [#allocation4], 1
    %12 = vsyncpa %s11, 0
    %13 = vsyncpa [#allocation5], 0
    %s14 = scalar_lea.sflag [#allocation5], 1
    %15 = vsyncpa %s14, 0
    loop: start=0, step=1, limit=4
    $region2: #{dwc_patch_embed.1} parent=1 // loop_pre_header
      _
    $region3: #{dwc_patch_embed.1} parent=1 // loop_header
      %s17 = sphi 0, %s21
      %p18 = scmp.ge.s32.totalorder %s17, 4
      %s27 = sphi 0, %s29
      %s30 = sphi 0, %s27
      %s31 = sphi 0, %s30
      %s47 = sphi 0, %s31
      %s51 = sphi 0, %s51
      %s53 = sphi 0, %s51
      %s54 = sphi 0, %s53
      %s68 = sphi 0, %s54
      %s72 = sphi 0, %s72
      %s74 = sphi 0, %s72
      %s75 = sphi 0, %s74
      %s89 = sphi 0, %s75
      %s93 = sphi 0, %s93
      %s95 = sphi 0, %s93
      %s96 = sphi 0, %s95
      %s110 = sphi 0, %s96
      %s114 = sphi 0, %s114
      %s116 = sphi 0, %s114
      %s117 = sphi 0, %s116
      %s131 = sphi 0, %s117
      %s137 = sphi 0, %s139
      %s140 = sphi 0, %s137
      %s141 = sphi 0, %s140
      %s157 = sphi 0, %s141
    $region4: #{dwc_patch_embed.1} parent=1 // loop_header_branch
      %20 = sbr.rel (%p18) target = $region8
    $region5: #{dwc_patch_embed.1} parent=1 // loop_body
      %s22 = ssub.s32 %s17, 1
      %s23 = ssub.s32 %s17, 2
      %s24 = sadd.s32 %s17, 1
      %s25 = ssub.s32 %s17, %s24
      %p26 = scmp.eq.s32.totalorder %s25, 0
      %s28 = sadd.s32 %s27, 1
      %s29 = scalar_select %p26, %s27, %s28
      %p32 = pneg %p26
      %p33 = scmp.eq.s32.totalorder %s17, 1
      %p34 = por %p32, %p33
      %p35 = scmp.ne.s32.totalorder %s27, %s30
      %p36 = scmp.eq.s32.totalorder %s17, 0
      %p37 = por %p35, %p36
      %p38 = scmp.ne.s32.totalorder %s27, %s30
      %p39 = scmp.eq.s32.totalorder %s22, 1
      %p40 = por %p38, %p39
      %p41 = scmp.ne.s32.totalorder %s30, %s31
      %p42 = scmp.eq.s32.totalorder %s22, 0
      %p43 = por %p41, %p42
      %p44 = scmp.ne.s32.totalorder %s30, %s31
      %p45 = scmp.eq.s32.totalorder %s23, 1
      %p46 = por %p44, %p45
      %p48 = scmp.ne.s32.totalorder %s31, %s47
      %p49 = scmp.eq.s32.totalorder %s23, 0
      %p50 = por %p48, %p49
      %s52 = sadd.s32 %s51, 1
      %p55 = scmp.eq.s32.totalorder %s17, 1
      %p56 = scmp.ne.s32.totalorder %s51, %s53
      %p57 = scmp.eq.s32.totalorder %s17, 0
      %p58 = por %p56, %p57
      %p59 = scmp.ne.s32.totalorder %s51, %s53
      %p60 = scmp.eq.s32.totalorder %s22, 1
      %p61 = por %p59, %p60
      %p62 = scmp.ne.s32.totalorder %s53, %s54
      %p63 = scmp.eq.s32.totalorder %s22, 0
      %p64 = por %p62, %p63
      %p65 = scmp.ne.s32.totalorder %s53, %s54
      %p66 = scmp.eq.s32.totalorder %s23, 1
      %p67 = por %p65, %p66
      %p69 = scmp.ne.s32.totalorder %s54, %s68
      %p70 = scmp.eq.s32.totalorder %s23, 0
      %p71 = por %p69, %p70
      %s73 = sadd.s32 %s72, 1
      %p76 = scmp.eq.s32.totalorder %s17, 1
      %p77 = scmp.ne.s32.totalorder %s72, %s74
      %p78 = scmp.eq.s32.totalorder %s17, 0
      %p79 = por %p77, %p78
      %p80 = scmp.ne.s32.totalorder %s72, %s74
      %p81 = scmp.eq.s32.totalorder %s22, 1
      %p82 = por %p80, %p81
      %p83 = scmp.ne.s32.totalorder %s74, %s75
      %p84 = scmp.eq.s32.totalorder %s22, 0
      %p85 = por %p83, %p84
      %p86 = scmp.ne.s32.totalorder %s74, %s75
      %p87 = scmp.eq.s32.totalorder %s23, 1
      %p88 = por %p86, %p87
      %p90 = scmp.ne.s32.totalorder %s75, %s89
      %p91 = scmp.eq.s32.totalorder %s23, 0
      %p92 = por %p90, %p91
      %s94 = sadd.s32 %s93, 1
      %p97 = scmp.eq.s32.totalorder %s17, 1
      %p98 = scmp.ne.s32.totalorder %s93, %s95
      %p99 = scmp.eq.s32.totalorder %s17, 0
      %p100 = por %p98, %p99
      %p101 = scmp.ne.s32.totalorder %s93, %s95
      %p102 = scmp.eq.s32.totalorder %s22, 1
      %p103 = por %p101, %p102
      %p104 = scmp.ne.s32.totalorder %s95, %s96
      %p105 = scmp.eq.s32.totalorder %s22, 0
      %p106 = por %p104, %p105
      %p107 = scmp.ne.s32.totalorder %s95, %s96
      %p108 = scmp.eq.s32.totalorder %s23, 1
      %p109 = por %p107, %p108
      %p111 = scmp.ne.s32.totalorder %s96, %s110
      %p112 = scmp.eq.s32.totalorder %s23, 0
      %p113 = por %p111, %p112
      %s115 = sadd.s32 %s114, 1
      %p118 = scmp.eq.s32.totalorder %s17, 1
      %p119 = scmp.ne.s32.totalorder %s114, %s116
      %p120 = scmp.eq.s32.totalorder %s17, 0
      %p121 = por %p119, %p120
      %p122 = scmp.ne.s32.totalorder %s114, %s116
      %p123 = scmp.eq.s32.totalorder %s22, 1
      %p124 = por %p122, %p123
      %p125 = scmp.ne.s32.totalorder %s116, %s117
      %p126 = scmp.eq.s32.totalorder %s22, 0
      %p127 = por %p125, %p126
      %p128 = scmp.ne.s32.totalorder %s116, %s117
      %p129 = scmp.eq.s32.totalorder %s23, 1
      %p130 = por %p128, %p129
      %p132 = scmp.ne.s32.totalorder %s117, %s131
      %p133 = scmp.eq.s32.totalorder %s23, 0
      %p134 = por %p132, %p133
      %s135 = ssub.s32 %s17, %s24
      %p136 = scmp.eq.s32.totalorder %s135, 0
      %s138 = sadd.s32 %s137, 1
      %s139 = scalar_select %p136, %s137, %s138
      %p142 = pneg %p136
      %p143 = scmp.eq.s32.totalorder %s17, 1
      %p144 = por %p142, %p143
      %p145 = scmp.ne.s32.totalorder %s137, %s140
      %p146 = scmp.eq.s32.totalorder %s17, 0
      %p147 = por %p145, %p146
      %p148 = scmp.ne.s32.totalorder %s137, %s140
      %p149 = scmp.eq.s32.totalorder %s22, 1
      %p150 = por %p148, %p149
      %p151 = scmp.ne.s32.totalorder %s140, %s141
      %p152 = scmp.eq.s32.totalorder %s22, 0
      %p153 = por %p151, %p152
      %p154 = scmp.ne.s32.totalorder %s140, %s141
      %p155 = scmp.eq.s32.totalorder %s23, 1
      %p156 = por %p154, %p155
      %p158 = scmp.ne.s32.totalorder %s141, %s157
      %p159 = scmp.eq.s32.totalorder %s23, 0
      %p160 = por %p158, %p159
      %p161 = scmp.le.s32.totalorder 1, %s17
      %p162 = scmp.lt.s32.totalorder %s17, 3
      %p163 = pnand %p161, %p162
      %p164 = pneg %p163
      // Predicated region
      $region9: #{dwc_patch_embed.1} parent=5 // pred_check
        _
      $region10: #{dwc_patch_embed.1} parent=5 // pred_check_branch
        %166 = sbr.rel (%p163) target = $region12
      $region11: #{dwc_patch_embed.1} parent=5 // pred_region
        %s167 = ssub.s32 %s17, 1
        // Predicated region
        $region13: #{dwc_patch_embed.1} parent=11 // pred_check
          %p168 = pneg %p64
        $region14: #{dwc_patch_embed.1} parent=11 // pred_check_branch
          %170 = sbr.rel (%p168) target = $region16
        $region15: #{dwc_patch_embed.1} parent=11 // pred_region
          _
        $region16: #{dwc_patch_embed.1} parent=11 // pred_fallthru
          _
        // Predicated region
        $region17: #{dwc_patch_embed.1} parent=11 // pred_check
          %p171 = pneg %p85
        $region18: #{dwc_patch_embed.1} parent=11 // pred_check_branch
          %173 = sbr.rel (%p171) target = $region20
        $region19: #{dwc_patch_embed.1} parent=11 // pred_region
          _
        $region20: #{dwc_patch_embed.1} parent=11 // pred_fallthru
          _
        // Predicated region
        $region21: #{dwc_patch_embed.1} parent=11 // pred_check
          %p174 = pneg %p106
        $region22: #{dwc_patch_embed.1} parent=11 // pred_check_branch
          %176 = sbr.rel (%p174) target = $region24
        $region23: #{dwc_patch_embed.1} parent=11 // pred_region
          _
        $region24: #{dwc_patch_embed.1} parent=11 // pred_fallthru
          _
        // Predicated region
        $region25: #{dwc_patch_embed.1} parent=11 // pred_check
          %p177 = pneg %p127
        $region26: #{dwc_patch_embed.1} parent=11 // pred_check_branch
          %179 = sbr.rel (%p177) target = $region28
        $region27: #{dwc_patch_embed.1} parent=11 // pred_region
          _
        $region28: #{dwc_patch_embed.1} parent=11 // pred_fallthru
          _
      $region12: #{dwc_patch_embed.1} parent=5 // pred_fallthru
        _
      %p180 = scmp.lt.s32.totalorder %s17, 2
      // Predicated region
      $region29: #{dwc_patch_embed.1} parent=5 // pred_check
        %p181 = pneg %p180
      $region30: #{dwc_patch_embed.1} parent=5 // pred_check_branch
        %183 = sbr.rel (%p181) target = $region32
      $region31: #{dwc_patch_embed.1} parent=5 // pred_region
        // Predicated region
        $region33: #{dwc_patch_embed.1} parent=31 // pred_check
          %p184 = pneg %p37
        $region34: #{dwc_patch_embed.1} parent=31 // pred_check_branch
          %186 = sbr.rel (%p184) target = $region36
        $region35: #{dwc_patch_embed.1} parent=31 // pred_region
          %s187 = sand.u32 %s27, 1
          %s188 = scalar_lea.sflag [#allocation4], %s187
          %s189 = sand.u32 %s27, 1
          %s190 = smul.addr %s189, 256
          %s191 = scalar_lea.vmem [#allocation3], %s190
          %s193 = ssub.s32 4096, 4096
          %194 = vsyncadd %s188, %s193
          %s195 = smul.addr %s17, 32
          %s196 = smul.addr %s195, 128
          %s197 = scalar_lea.hbm %s0, %s196
          %s198 = sshll.u32 %s191, 4
          %s199 = int_to_ptr.vmem [resolvable:$true] %s198
          %204 = dma.hbm_to_vmem [thread:$0]  %s197, 4096, %s199, %s188, 128, 128, 8
        $region36: #{dwc_patch_embed.1} parent=31 // pred_fallthru
          _
      $region32: #{dwc_patch_embed.1} parent=5 // pred_fallthru
        _
      %p205 = scmp.le.s32.totalorder 1, %s17
      %p206 = scmp.lt.s32.totalorder %s17, 3
      %p207 = pnand %p205, %p206
      %p208 = pneg %p207
      // Predicated region
      $region37: #{dwc_patch_embed.1} parent=5 // pred_check
        _
      $region38: #{dwc_patch_embed.1} parent=5 // pred_check_branch
        %210 = sbr.rel (%p207) target = $region40
      $region39: #{dwc_patch_embed.1} parent=5 // pred_region
        %s211 = ssub.s32 %s17, 1
        %s212 = sand.u32 %s30, 1
        %s213 = scalar_lea.sflag [#allocation4], %s212
        %s214 = sand.u32 %s30, 1
        %s215 = smul.addr %s214, 256
        %s216 = scalar_lea.vmem [#allocation3], %s215
        // Predicated region
        $region41: #{dwc_patch_embed.1} parent=39 // pred_check
          %p217 = pneg %p43
        $region42: #{dwc_patch_embed.1} parent=39 // pred_check_branch
          %219 = sbr.rel (%p217) target = $region44
        $region43: #{dwc_patch_embed.1} parent=39 // pred_region
          %220 = dma.done %s213, 4096
        $region44: #{dwc_patch_embed.1} parent=39 // pred_fallthru
          _
        %s221 = sand.u32 %s30, 1
        %s222 = scalar_lea.sflag [#allocation4], %s221
        %s223 = sand.u32 %s30, 1
        %s224 = smul.addr %s223, 256
        %s225 = scalar_lea.vmem [#allocation3], %s224
        %p226 = pneg %p43
        %p227 = pneg %p40
        %p228 = pneg %p64
        %p229 = pneg %p61
        %p230 = pneg %p85
        %p231 = pneg %p82
        %p232 = pneg %p106
        %p233 = pneg %p103
        %p234 = pneg %p127
        %p235 = pneg %p124
        %p236 = pneg %p153
        %p237 = pneg %p150
        %s238 = sand.u32 %s140, 1
        %s239 = scalar_lea.sflag [#allocation5], %s238
        %s240 = sand.u32 %s140, 1
        %s241 = smul.addr %s240, 256
        %s242 = scalar_lea.vmem [#allocation6], %s241
        %244 = vst [vmem:[#allocation2] sm:$0xff] 0.0
        %245 = vst [vmem:[#allocation2 + $0x8] sm:$0xff] 0.0
        %246 = vst [vmem:[#allocation2 + $0x10] sm:$0x3] 0.0
        %247 = vst [vmem:[#allocation2 + $0x18] sm:$0xff] 0.0
        %248 = vst [vmem:[#allocation2 + $0x20] sm:$0xff] 0.0
        %249 = vst [vmem:[#allocation2 + $0x28] sm:$0x3] 0.0
        %250 = vst [vmem:[#allocation2 + $0x30] sm:$0xff] 0.0
        %251 = vst [vmem:[#allocation2 + $0x38] sm:$0xff] 0.0
        %252 = vst [vmem:[#allocation2 + $0x40] sm:$0x3] 0.0
        %253 = vst [vmem:[#allocation2 + $0x48] sm:$0xff] 0.0
        %254 = vst [vmem:[#allocation2 + $0x50] sm:$0xff] 0.0
        %255 = vst [vmem:[#allocation2 + $0x58] sm:$0x3] 0.0
        %256 = vst [vmem:[#allocation2 + $0x60] sm:$0xff] 0.0
        %257 = vst [vmem:[#allocation2 + $0x68] sm:$0xff] 0.0
        %258 = vst [vmem:[#allocation2 + $0x70] sm:$0x3] 0.0
        %259 = vst [vmem:[#allocation2 + $0x78] sm:$0xff] 0.0
        %260 = vst [vmem:[#allocation2 + $0x80] sm:$0xff] 0.0
        %261 = vst [vmem:[#allocation2 + $0x88] sm:$0x3] 0.0
        %262 = vst [vmem:[#allocation2 + $0x90] sm:$0xff] 0.0
        %263 = vst [vmem:[#allocation2 + $0x98] sm:$0xff] 0.0
        %264 = vst [vmem:[#allocation2 + $0xa0] sm:$0x3] 0.0
        %265 = vst [vmem:[#allocation2 + $0xa8] sm:$0xff] 0.0
        %266 = vst [vmem:[#allocation2 + $0xb0] sm:$0xff] 0.0
        %267 = vst [vmem:[#allocation2 + $0xb8] sm:$0x3] 0.0
        %268 = vst [vmem:[#allocation2 + $0xc0] sm:$0xff] 0.0
        %269 = vst [vmem:[#allocation2 + $0xc8] sm:$0xff] 0.0
        %270 = vst [vmem:[#allocation2 + $0xd0] sm:$0x3] 0.0
        %271 = vst [vmem:[#allocation2 + $0xd8] sm:$0xff] 0.0
        %272 = vst [vmem:[#allocation2 + $0xe0] sm:$0xff] 0.0
        %273 = vst [vmem:[#allocation2 + $0xe8] sm:$0x3] 0.0
        %274 = vst [vmem:[#allocation2 + $0xf0] sm:$0xff] 0.0
        %275 = vst [vmem:[#allocation2 + $0xf8] sm:$0xff] 0.0
        %276 = vst [vmem:[#allocation2 + $0x100] sm:$0x3] 0.0
        %277 = vst [vmem:[#allocation2 + $0x108] sm:$0xff] 0.0
        %278 = vst [vmem:[#allocation2 + $0x110] sm:$0xff] 0.0
        %279 = vst [vmem:[#allocation2 + $0x118] sm:$0x3] 0.0
        %280 = vst [vmem:[#allocation2 + $0x120] sm:$0xff] 0.0
        %281 = vst [vmem:[#allocation2 + $0x128] sm:$0xff] 0.0
        %282 = vst [vmem:[#allocation2 + $0x130] sm:$0x3] 0.0
        %283 = vst [vmem:[#allocation2 + $0x138] sm:$0xff] 0.0
        %284 = vst [vmem:[#allocation2 + $0x140] sm:$0xff] 0.0
        %285 = vst [vmem:[#allocation2 + $0x148] sm:$0x3] 0.0
        %286 = vst [vmem:[#allocation2 + $0x150] sm:$0xff] 0.0
        %287 = vst [vmem:[#allocation2 + $0x158] sm:$0xff] 0.0
        %288 = vst [vmem:[#allocation2 + $0x160] sm:$0x3] 0.0
        %289 = vst [vmem:[#allocation2 + $0x168] sm:$0xff] 0.0
        %290 = vst [vmem:[#allocation2 + $0x170] sm:$0xff] 0.0
        %291 = vst [vmem:[#allocation2 + $0x178] sm:$0x3] 0.0
        %292 = vst [vmem:[#allocation2 + $0x180] sm:$0xff] 0.0
        %293 = vst [vmem:[#allocation2 + $0x188] sm:$0xff] 0.0
        %294 = vst [vmem:[#allocation2 + $0x190] sm:$0x3] 0.0
        %295 = vst [vmem:[#allocation2 + $0x198] sm:$0xff] 0.0
        %296 = vst [vmem:[#allocation2 + $0x1a0] sm:$0xff] 0.0
        %297 = vst [vmem:[#allocation2 + $0x1a8] sm:$0x3] 0.0
        %v298 = vld [vmem:[%s216] sm:$0xff]
        %v299 = vld [vmem:[%s216 + $0x8] sm:$0xff]
        %v300 = vld [vmem:[%s216 + $0x10] sm:$0xff]
        %v301 = vld [vmem:[%s216 + $0x18] sm:$0xff]
        %v302 = vld [vmem:[%s216 + $0x20] sm:$0xff]
        %v303 = vld [vmem:[%s216 + $0x28] sm:$0xff]
        %v304 = vld [vmem:[%s216 + $0x30] sm:$0xff]
        %v305 = vld [vmem:[%s216 + $0x38] sm:$0xff]
        %v306 = vld [vmem:[%s216 + $0x40] sm:$0xff]
        %v307 = vld [vmem:[%s216 + $0x48] sm:$0xff]
        %v308 = vld [vmem:[%s216 + $0x50] sm:$0xff]
        %v309 = vld [vmem:[%s216 + $0x58] sm:$0xff]
        %v310 = vld [vmem:[%s216 + $0x60] sm:$0xff]
        %v311 = vld [vmem:[%s216 + $0x68] sm:$0xff]
        %v312 = vld [vmem:[%s216 + $0x70] sm:$0xff]
        %v313 = vld [vmem:[%s216 + $0x78] sm:$0xff]
        %v314 = vld [vmem:[%s216 + $0x80] sm:$0xff]
        %v315 = vld [vmem:[%s216 + $0x88] sm:$0xff]
        %v316 = vld [vmem:[%s216 + $0x90] sm:$0xff]
        %v317 = vld [vmem:[%s216 + $0x98] sm:$0xff]
        %v318 = vld [vmem:[%s216 + $0xa0] sm:$0xff]
        %v319 = vld [vmem:[%s216 + $0xa8] sm:$0xff]
        %v320 = vld [vmem:[%s216 + $0xb0] sm:$0xff]
        %v321 = vld [vmem:[%s216 + $0xb8] sm:$0xff]
        %v322 = vld [vmem:[%s216 + $0xc0] sm:$0xff]
        %v323 = vld [vmem:[%s216 + $0xc8] sm:$0xff]
        %v324 = vld [vmem:[%s216 + $0xd0] sm:$0xff]
        %v325 = vld [vmem:[%s216 + $0xd8] sm:$0xff]
        %v326 = vld [vmem:[%s216 + $0xe0] sm:$0xff]
        %v327 = vld [vmem:[%s216 + $0xe8] sm:$0xff]
        %v328 = vld [vmem:[%s216 + $0xf0] sm:$0xff]
        %v329 = vld [vmem:[%s216 + $0xf8] sm:$0xff]
        %s330 = scalar_lea.vmem [#allocation2], 24
        %331 = vst [vmem:[%s330 + $0x1] sm:$0xff] %v298
        %332 = vst [vmem:[%s330 + $0x9] sm:$0xff] %v299
        %333 = vst [vmem:[%s330 + $0x19] sm:$0xff] %v300
        %334 = vst [vmem:[%s330 + $0x21] sm:$0xff] %v301
        %335 = vst [vmem:[%s330 + $0x31] sm:$0xff] %v302
        %336 = vst [vmem:[%s330 + $0x39] sm:$0xff] %v303
        %337 = vst [vmem:[%s330 + $0x49] sm:$0xff] %v304
        %338 = vst [vmem:[%s330 + $0x51] sm:$0xff] %v305
        %339 = vst [vmem:[%s330 + $0x61] sm:$0xff] %v306
        %340 = vst [vmem:[%s330 + $0x69] sm:$0xff] %v307
        %341 = vst [vmem:[%s330 + $0x79] sm:$0xff] %v308
        %342 = vst [vmem:[%s330 + $0x81] sm:$0xff] %v309
        %343 = vst [vmem:[%s330 + $0x91] sm:$0xff] %v310
        %344 = vst [vmem:[%s330 + $0x99] sm:$0xff] %v311
        %345 = vst [vmem:[%s330 + $0xa9] sm:$0xff] %v312
        %346 = vst [vmem:[%s330 + $0xb1] sm:$0xff] %v313
        %347 = vst [vmem:[%s330 + $0xc1] sm:$0xff] %v314
        %348 = vst [vmem:[%s330 + $0xc9] sm:$0xff] %v315
        %349 = vst [vmem:[%s330 + $0xd9] sm:$0xff] %v316
        %350 = vst [vmem:[%s330 + $0xe1] sm:$0xff] %v317
        %351 = vst [vmem:[%s330 + $0xf1] sm:$0xff] %v318
        %352 = vst [vmem:[%s330 + $0xf9] sm:$0xff] %v319
        %353 = vst [vmem:[%s330 + $0x109] sm:$0xff] %v320
        %354 = vst [vmem:[%s330 + $0x111] sm:$0xff] %v321
        %355 = vst [vmem:[%s330 + $0x121] sm:$0xff] %v322
        %356 = vst [vmem:[%s330 + $0x129] sm:$0xff] %v323
        %357 = vst [vmem:[%s330 + $0x139] sm:$0xff] %v324
        %358 = vst [vmem:[%s330 + $0x141] sm:$0xff] %v325
        %359 = vst [vmem:[%s330 + $0x151] sm:$0xff] %v326
        %360 = vst [vmem:[%s330 + $0x159] sm:$0xff] %v327
        %361 = vst [vmem:[%s330 + $0x169] sm:$0xff] %v328
        %362 = vst [vmem:[%s330 + $0x171] sm:$0xff] %v329
        %v363 = vld [vmem:[#allocation2] sm:$0xff]
        %v364 = vld [vmem:[#allocation2 + $0x8] sm:$0xff]
        %v365 = vld [vmem:[#allocation2 + $0x18] sm:$0xff]
        %v366 = vld [vmem:[#allocation2 + $0x20] sm:$0xff]
        %v367 = vld [vmem:[#allocation2 + $0x30] sm:$0xff]
        %v368 = vld [vmem:[#allocation2 + $0x38] sm:$0xff]
        %v369 = vld [vmem:[#allocation2 + $0x48] sm:$0xff]
        %v370 = vld [vmem:[#allocation2 + $0x50] sm:$0xff]
        %v371 = vld [vmem:[#allocation2 + $0x60] sm:$0xff]
        %v372 = vld [vmem:[#allocation2 + $0x68] sm:$0xff]
        %v373 = vld [vmem:[#allocation2 + $0x78] sm:$0xff]
        %v374 = vld [vmem:[#allocation2 + $0x80] sm:$0xff]
        %v375 = vld [vmem:[#allocation2 + $0x90] sm:$0xff]
        %v376 = vld [vmem:[#allocation2 + $0x98] sm:$0xff]
        %v377 = vld [vmem:[#allocation2 + $0xa8] sm:$0xff]
        %v378 = vld [vmem:[#allocation2 + $0xb0] sm:$0xff]
        %v379 = vld [vmem:[#allocation2 + $0xc0] sm:$0xff]
        %v380 = vld [vmem:[#allocation2 + $0xc8] sm:$0xff]
        %v381 = vld [vmem:[#allocation2 + $0xd8] sm:$0xff]
        %v382 = vld [vmem:[#allocation2 + $0xe0] sm:$0xff]
        %v383 = vld [vmem:[#allocation2 + $0xf0] sm:$0xff]
        %v384 = vld [vmem:[#allocation2 + $0xf8] sm:$0xff]
        %v385 = vld [vmem:[#allocation2 + $0x108] sm:$0xff]
        %v386 = vld [vmem:[#allocation2 + $0x110] sm:$0xff]
        %v387 = vld [vmem:[#allocation2 + $0x120] sm:$0xff]
        %v388 = vld [vmem:[#allocation2 + $0x128] sm:$0xff]
        %v389 = vld [vmem:[#allocation2 + $0x138] sm:$0xff]
        %v390 = vld [vmem:[#allocation2 + $0x140] sm:$0xff]
        %v391 = vld [vmem:[#allocation2 + $0x150] sm:$0xff]
        %v392 = vld [vmem:[#allocation2 + $0x158] sm:$0xff]
        %v393 = vld [vmem:[#allocation2 + $0x168] sm:$0xff]
        %v394 = vld [vmem:[#allocation2 + $0x170] sm:$0xff]
        %v395 = vld [vmem:[%s1] sm:$0x1]
        %v397 = vlaneseq
        %v398 = vshrl.u32 %v397, 7
        %v399 = vsub.s32 0, %v398
        %v400 = vrot.slane %v395, %v399
        %v402 = vmul.f32 %v363, %v400
        %v403 = vmul.f32 %v364, %v400
        %v404 = vmul.f32 %v365, %v400
        %v405 = vmul.f32 %v366, %v400
        %v406 = vmul.f32 %v367, %v400
        %v407 = vmul.f32 %v368, %v400
        %v408 = vmul.f32 %v369, %v400
        %v409 = vmul.f32 %v370, %v400
        %v410 = vmul.f32 %v371, %v400
        %v411 = vmul.f32 %v372, %v400
        %v412 = vmul.f32 %v373, %v400
        %v413 = vmul.f32 %v374, %v400
        %v414 = vmul.f32 %v375, %v400
        %v415 = vmul.f32 %v376, %v400
        %v416 = vmul.f32 %v377, %v400
        %v417 = vmul.f32 %v378, %v400
        %v418 = vmul.f32 %v379, %v400
        %v419 = vmul.f32 %v380, %v400
        %v420 = vmul.f32 %v381, %v400
        %v421 = vmul.f32 %v382, %v400
        %v422 = vmul.f32 %v383, %v400
        %v423 = vmul.f32 %v384, %v400
        %v424 = vmul.f32 %v385, %v400
        %v425 = vmul.f32 %v386, %v400
        %v426 = vmul.f32 %v387, %v400
        %v427 = vmul.f32 %v388, %v400
        %v428 = vmul.f32 %v389, %v400
        %v429 = vmul.f32 %v390, %v400
        %v430 = vmul.f32 %v391, %v400
        %v431 = vmul.f32 %v392, %v400
        %v432 = vmul.f32 %v393, %v400
        %v433 = vmul.f32 %v394, %v400
        %v434 = vadd.f32 %v402, 0.0
        %v435 = vadd.f32 %v403, 0.0
        %v436 = vadd.f32 %v404, 0.0
        %v437 = vadd.f32 %v405, 0.0
        %v438 = vadd.f32 %v406, 0.0
        %v439 = vadd.f32 %v407, 0.0
        %v440 = vadd.f32 %v408, 0.0
        %v441 = vadd.f32 %v409, 0.0
        %v442 = vadd.f32 %v410, 0.0
        %v443 = vadd.f32 %v411, 0.0
        %v444 = vadd.f32 %v412, 0.0
        %v445 = vadd.f32 %v413, 0.0
        %v446 = vadd.f32 %v414, 0.0
        %v447 = vadd.f32 %v415, 0.0
        %v448 = vadd.f32 %v416, 0.0
        %v449 = vadd.f32 %v417, 0.0
        %v450 = vadd.f32 %v418, 0.0
        %v451 = vadd.f32 %v419, 0.0
        %v452 = vadd.f32 %v420, 0.0
        %v453 = vadd.f32 %v421, 0.0
        %v454 = vadd.f32 %v422, 0.0
        %v455 = vadd.f32 %v423, 0.0
        %v456 = vadd.f32 %v424, 0.0
        %v457 = vadd.f32 %v425, 0.0
        %v458 = vadd.f32 %v426, 0.0
        %v459 = vadd.f32 %v427, 0.0
        %v460 = vadd.f32 %v428, 0.0
        %v461 = vadd.f32 %v429, 0.0
        %v462 = vadd.f32 %v430, 0.0
        %v463 = vadd.f32 %v431, 0.0
        %v464 = vadd.f32 %v432, 0.0
        %v465 = vadd.f32 %v433, 0.0
        %v466 = vld [vmem:[#allocation2 + $0x1] sm:$0xff]
        %v467 = vld [vmem:[#allocation2 + $0x9] sm:$0xff]
        %v468 = vld [vmem:[#allocation2 + $0x19] sm:$0xff]
        %v469 = vld [vmem:[#allocation2 + $0x21] sm:$0xff]
        %v470 = vld [vmem:[#allocation2 + $0x31] sm:$0xff]
        %v471 = vld [vmem:[#allocation2 + $0x39] sm:$0xff]
        %v472 = vld [vmem:[#allocation2 + $0x49] sm:$0xff]
        %v473 = vld [vmem:[#allocation2 + $0x51] sm:$0xff]
        %v474 = vld [vmem:[#allocation2 + $0x61] sm:$0xff]
        %v475 = vld [vmem:[#allocation2 + $0x69] sm:$0xff]
        %v476 = vld [vmem:[#allocation2 + $0x79] sm:$0xff]
        %v477 = vld [vmem:[#allocation2 + $0x81] sm:$0xff]
        %v478 = vld [vmem:[#allocation2 + $0x91] sm:$0xff]
        %v479 = vld [vmem:[#allocation2 + $0x99] sm:$0xff]
        %v480 = vld [vmem:[#allocation2 + $0xa9] sm:$0xff]
        %v481 = vld [vmem:[#allocation2 + $0xb1] sm:$0xff]
        %v482 = vld [vmem:[#allocation2 + $0xc1] sm:$0xff]
        %v483 = vld [vmem:[#allocation2 + $0xc9] sm:$0xff]
        %v484 = vld [vmem:[#allocation2 + $0xd9] sm:$0xff]
        %v485 = vld [vmem:[#allocation2 + $0xe1] sm:$0xff]
        %v486 = vld [vmem:[#allocation2 + $0xf1] sm:$0xff]
        %v487 = vld [vmem:[#allocation2 + $0xf9] sm:$0xff]
        %v488 = vld [vmem:[#allocation2 + $0x109] sm:$0xff]
        %v489 = vld [vmem:[#allocation2 + $0x111] sm:$0xff]
        %v490 = vld [vmem:[#allocation2 + $0x121] sm:$0xff]
        %v491 = vld [vmem:[#allocation2 + $0x129] sm:$0xff]
        %v492 = vld [vmem:[#allocation2 + $0x139] sm:$0xff]
        %v493 = vld [vmem:[#allocation2 + $0x141] sm:$0xff]
        %v494 = vld [vmem:[#allocation2 + $0x151] sm:$0xff]
        %v495 = vld [vmem:[#allocation2 + $0x159] sm:$0xff]
        %v496 = vld [vmem:[#allocation2 + $0x169] sm:$0xff]
        %v497 = vld [vmem:[#allocation2 + $0x171] sm:$0xff]
        %s498 = scalar_lea.vmem %s1, 1
        %v499 = vld [vmem:[%s498] sm:$0x1]
        %v501 = vlaneseq
        %v502 = vshrl.u32 %v501, 7
        %v503 = vsub.s32 0, %v502
        %v504 = vrot.slane %v499, %v503
        %v506 = vmul.f32 %v466, %v504
        %v507 = vmul.f32 %v467, %v504
        %v508 = vmul.f32 %v468, %v504
        %v509 = vmul.f32 %v469, %v504
        %v510 = vmul.f32 %v470, %v504
        %v511 = vmul.f32 %v471, %v504
        %v512 = vmul.f32 %v472, %v504
        %v513 = vmul.f32 %v473, %v504
        %v514 = vmul.f32 %v474, %v504
        %v515 = vmul.f32 %v475, %v504
        %v516 = vmul.f32 %v476, %v504
        %v517 = vmul.f32 %v477, %v504
        %v518 = vmul.f32 %v478, %v504
        %v519 = vmul.f32 %v479, %v504
        %v520 = vmul.f32 %v480, %v504
        %v521 = vmul.f32 %v481, %v504
        %v522 = vmul.f32 %v482, %v504
        %v523 = vmul.f32 %v483, %v504
        %v524 = vmul.f32 %v484, %v504
        %v525 = vmul.f32 %v485, %v504
        %v526 = vmul.f32 %v486, %v504
        %v527 = vmul.f32 %v487, %v504
        %v528 = vmul.f32 %v488, %v504
        %v529 = vmul.f32 %v489, %v504
        %v530 = vmul.f32 %v490, %v504
        %v531 = vmul.f32 %v491, %v504
        %v532 = vmul.f32 %v492, %v504
        %v533 = vmul.f32 %v493, %v504
        %v534 = vmul.f32 %v494, %v504
        %v535 = vmul.f32 %v495, %v504
        %v536 = vmul.f32 %v496, %v504
        %v537 = vmul.f32 %v497, %v504
        %v538 = vadd.f32 %v434, %v506
        %v539 = vadd.f32 %v435, %v507
        %v540 = vadd.f32 %v436, %v508
        %v541 = vadd.f32 %v437, %v509
        %v542 = vadd.f32 %v438, %v510
        %v543 = vadd.f32 %v439, %v511
        %v544 = vadd.f32 %v440, %v512
        %v545 = vadd.f32 %v441, %v513
        %v546 = vadd.f32 %v442, %v514
        %v547 = vadd.f32 %v443, %v515
        %v548 = vadd.f32 %v444, %v516
        %v549 = vadd.f32 %v445, %v517
        %v550 = vadd.f32 %v446, %v518
        %v551 = vadd.f32 %v447, %v519
        %v552 = vadd.f32 %v448, %v520
        %v553 = vadd.f32 %v449, %v521
        %v554 = vadd.f32 %v450, %v522
        %v555 = vadd.f32 %v451, %v523
        %v556 = vadd.f32 %v452, %v524
        %v557 = vadd.f32 %v453, %v525
        %v558 = vadd.f32 %v454, %v526
        %v559 = vadd.f32 %v455, %v527
        %v560 = vadd.f32 %v456, %v528
        %v561 = vadd.f32 %v457, %v529
        %v562 = vadd.f32 %v458, %v530
        %v563 = vadd.f32 %v459, %v531
        %v564 = vadd.f32 %v460, %v532
        %v565 = vadd.f32 %v461, %v533
        %v566 = vadd.f32 %v462, %v534
        %v567 = vadd.f32 %v463, %v535
        %v568 = vadd.f32 %v464, %v536
        %v569 = vadd.f32 %v465, %v537
        %v570 = vld [vmem:[#allocation2 + $0x2] sm:$0xff]
        %v571 = vld [vmem:[#allocation2 + $0xa] sm:$0xff]
        %v572 = vld [vmem:[#allocation2 + $0x1a] sm:$0xff]
        %v573 = vld [vmem:[#allocation2 + $0x22] sm:$0xff]
        %v574 = vld [vmem:[#allocation2 + $0x32] sm:$0xff]
        %v575 = vld [vmem:[#allocation2 + $0x3a] sm:$0xff]
        %v576 = vld [vmem:[#allocation2 + $0x4a] sm:$0xff]
        %v577 = vld [vmem:[#allocation2 + $0x52] sm:$0xff]
        %v578 = vld [vmem:[#allocation2 + $0x62] sm:$0xff]
        %v579 = vld [vmem:[#allocation2 + $0x6a] sm:$0xff]
        %v580 = vld [vmem:[#allocation2 + $0x7a] sm:$0xff]
        %v581 = vld [vmem:[#allocation2 + $0x82] sm:$0xff]
        %v582 = vld [vmem:[#allocation2 + $0x92] sm:$0xff]
        %v583 = vld [vmem:[#allocation2 + $0x9a] sm:$0xff]
        %v584 = vld [vmem:[#allocation2 + $0xaa] sm:$0xff]
        %v585 = vld [vmem:[#allocation2 + $0xb2] sm:$0xff]
        %v586 = vld [vmem:[#allocation2 + $0xc2] sm:$0xff]
        %v587 = vld [vmem:[#allocation2 + $0xca] sm:$0xff]
        %v588 = vld [vmem:[#allocation2 + $0xda] sm:$0xff]
        %v589 = vld [vmem:[#allocation2 + $0xe2] sm:$0xff]
        %v590 = vld [vmem:[#allocation2 + $0xf2] sm:$0xff]
        %v591 = vld [vmem:[#allocation2 + $0xfa] sm:$0xff]
        %v592 = vld [vmem:[#allocation2 + $0x10a] sm:$0xff]
        %v593 = vld [vmem:[#allocation2 + $0x112] sm:$0xff]
        %v594 = vld [vmem:[#allocation2 + $0x122] sm:$0xff]
        %v595 = vld [vmem:[#allocation2 + $0x12a] sm:$0xff]
        %v596 = vld [vmem:[#allocation2 + $0x13a] sm:$0xff]
        %v597 = vld [vmem:[#allocation2 + $0x142] sm:$0xff]
        %v598 = vld [vmem:[#allocation2 + $0x152] sm:$0xff]
        %v599 = vld [vmem:[#allocation2 + $0x15a] sm:$0xff]
        %v600 = vld [vmem:[#allocation2 + $0x16a] sm:$0xff]
        %v601 = vld [vmem:[#allocation2 + $0x172] sm:$0xff]
        %s602 = scalar_lea.vmem %s1, 2
        %v603 = vld [vmem:[%s602] sm:$0x1]
        %v605 = vlaneseq
        %v606 = vshrl.u32 %v605, 7
        %v607 = vsub.s32 0, %v606
        %v608 = vrot.slane %v603, %v607
        %v610 = vmul.f32 %v570, %v608
        %v611 = vmul.f32 %v571, %v608
        %v612 = vmul.f32 %v572, %v608
        %v613 = vmul.f32 %v573, %v608
        %v614 = vmul.f32 %v574, %v608
        %v615 = vmul.f32 %v575, %v608
        %v616 = vmul.f32 %v576, %v608
        %v617 = vmul.f32 %v577, %v608
        %v618 = vmul.f32 %v578, %v608
        %v619 = vmul.f32 %v579, %v608
        %v620 = vmul.f32 %v580, %v608
        %v621 = vmul.f32 %v581, %v608
        %v622 = vmul.f32 %v582, %v608
        %v623 = vmul.f32 %v583, %v608
        %v624 = vmul.f32 %v584, %v608
        %v625 = vmul.f32 %v585, %v608
        %v626 = vmul.f32 %v586, %v608
        %v627 = vmul.f32 %v587, %v608
        %v628 = vmul.f32 %v588, %v608
        %v629 = vmul.f32 %v589, %v608
        %v630 = vmul.f32 %v590, %v608
        %v631 = vmul.f32 %v591, %v608
        %v632 = vmul.f32 %v592, %v608
        %v633 = vmul.f32 %v593, %v608
        %v634 = vmul.f32 %v594, %v608
        %v635 = vmul.f32 %v595, %v608
        %v636 = vmul.f32 %v596, %v608
        %v637 = vmul.f32 %v597, %v608
        %v638 = vmul.f32 %v598, %v608
        %v639 = vmul.f32 %v599, %v608
        %v640 = vmul.f32 %v600, %v608
        %v641 = vmul.f32 %v601, %v608
        %v642 = vadd.f32 %v538, %v610
        %v643 = vadd.f32 %v539, %v611
        %v644 = vadd.f32 %v540, %v612
        %v645 = vadd.f32 %v541, %v613
        %v646 = vadd.f32 %v542, %v614
        %v647 = vadd.f32 %v543, %v615
        %v648 = vadd.f32 %v544, %v616
        %v649 = vadd.f32 %v545, %v617
        %v650 = vadd.f32 %v546, %v618
        %v651 = vadd.f32 %v547, %v619
        %v652 = vadd.f32 %v548, %v620
        %v653 = vadd.f32 %v549, %v621
        %v654 = vadd.f32 %v550, %v622
        %v655 = vadd.f32 %v551, %v623
        %v656 = vadd.f32 %v552, %v624
        %v657 = vadd.f32 %v553, %v625
        %v658 = vadd.f32 %v554, %v626
        %v659 = vadd.f32 %v555, %v627
        %v660 = vadd.f32 %v556, %v628
        %v661 = vadd.f32 %v557, %v629
        %v662 = vadd.f32 %v558, %v630
        %v663 = vadd.f32 %v559, %v631
        %v664 = vadd.f32 %v560, %v632
        %v665 = vadd.f32 %v561, %v633
        %v666 = vadd.f32 %v562, %v634
        %v667 = vadd.f32 %v563, %v635
        %v668 = vadd.f32 %v564, %v636
        %v669 = vadd.f32 %v565, %v637
        %v670 = vadd.f32 %v566, %v638
        %v671 = vadd.f32 %v567, %v639
        %v672 = vadd.f32 %v568, %v640
        %v673 = vadd.f32 %v569, %v641
        %v674 = vld [vmem:[%s330] sm:$0xff]
        %v675 = vld [vmem:[%s330 + $0x8] sm:$0xff]
        %v676 = vld [vmem:[%s330 + $0x18] sm:$0xff]
        %v677 = vld [vmem:[%s330 + $0x20] sm:$0xff]
        %v678 = vld [vmem:[%s330 + $0x30] sm:$0xff]
        %v679 = vld [vmem:[%s330 + $0x38] sm:$0xff]
        %v680 = vld [vmem:[%s330 + $0x48] sm:$0xff]
        %v681 = vld [vmem:[%s330 + $0x50] sm:$0xff]
        %v682 = vld [vmem:[%s330 + $0x60] sm:$0xff]
        %v683 = vld [vmem:[%s330 + $0x68] sm:$0xff]
        %v684 = vld [vmem:[%s330 + $0x78] sm:$0xff]
        %v685 = vld [vmem:[%s330 + $0x80] sm:$0xff]
        %v686 = vld [vmem:[%s330 + $0x90] sm:$0xff]
        %v687 = vld [vmem:[%s330 + $0x98] sm:$0xff]
        %v688 = vld [vmem:[%s330 + $0xa8] sm:$0xff]
        %v689 = vld [vmem:[%s330 + $0xb0] sm:$0xff]
        %v690 = vld [vmem:[%s330 + $0xc0] sm:$0xff]
        %v691 = vld [vmem:[%s330 + $0xc8] sm:$0xff]
        %v692 = vld [vmem:[%s330 + $0xd8] sm:$0xff]
        %v693 = vld [vmem:[%s330 + $0xe0] sm:$0xff]
        %v694 = vld [vmem:[%s330 + $0xf0] sm:$0xff]
        %v695 = vld [vmem:[%s330 + $0xf8] sm:$0xff]
        %v696 = vld [vmem:[%s330 + $0x108] sm:$0xff]
        %v697 = vld [vmem:[%s330 + $0x110] sm:$0xff]
        %v698 = vld [vmem:[%s330 + $0x120] sm:$0xff]
        %v699 = vld [vmem:[%s330 + $0x128] sm:$0xff]
        %v700 = vld [vmem:[%s330 + $0x138] sm:$0xff]
        %v701 = vld [vmem:[%s330 + $0x140] sm:$0xff]
        %v702 = vld [vmem:[%s330 + $0x150] sm:$0xff]
        %v703 = vld [vmem:[%s330 + $0x158] sm:$0xff]
        %v704 = vld [vmem:[%s330 + $0x168] sm:$0xff]
        %v705 = vld [vmem:[%s330 + $0x170] sm:$0xff]
        %s706 = scalar_lea.vmem %s1, 3
        %v707 = vld [vmem:[%s706] sm:$0x1]
        %v709 = vlaneseq
        %v710 = vshrl.u32 %v709, 7
        %v711 = vsub.s32 0, %v710
        %v712 = vrot.slane %v707, %v711
        %v714 = vmul.f32 %v674, %v712
        %v715 = vmul.f32 %v675, %v712
        %v716 = vmul.f32 %v676, %v712
        %v717 = vmul.f32 %v677, %v712
        %v718 = vmul.f32 %v678, %v712
        %v719 = vmul.f32 %v679, %v712
        %v720 = vmul.f32 %v680, %v712
        %v721 = vmul.f32 %v681, %v712
        %v722 = vmul.f32 %v682, %v712
        %v723 = vmul.f32 %v683, %v712
        %v724 = vmul.f32 %v684, %v712
        %v725 = vmul.f32 %v685, %v712
        %v726 = vmul.f32 %v686, %v712
        %v727 = vmul.f32 %v687, %v712
        %v728 = vmul.f32 %v688, %v712
        %v729 = vmul.f32 %v689, %v712
        %v730 = vmul.f32 %v690, %v712
        %v731 = vmul.f32 %v691, %v712
        %v732 = vmul.f32 %v692, %v712
        %v733 = vmul.f32 %v693, %v712
        %v734 = vmul.f32 %v694, %v712
        %v735 = vmul.f32 %v695, %v712
        %v736 = vmul.f32 %v696, %v712
        %v737 = vmul.f32 %v697, %v712
        %v738 = vmul.f32 %v698, %v712
        %v739 = vmul.f32 %v699, %v712
        %v740 = vmul.f32 %v700, %v712
        %v741 = vmul.f32 %v701, %v712
        %v742 = vmul.f32 %v702, %v712
        %v743 = vmul.f32 %v703, %v712
        %v744 = vmul.f32 %v704, %v712
        %v745 = vmul.f32 %v705, %v712
        %v746 = vadd.f32 %v642, %v714
        %v747 = vadd.f32 %v643, %v715
        %v748 = vadd.f32 %v644, %v716
        %v749 = vadd.f32 %v645, %v717
        %v750 = vadd.f32 %v646, %v718
        %v751 = vadd.f32 %v647, %v719
        %v752 = vadd.f32 %v648, %v720
        %v753 = vadd.f32 %v649, %v721
        %v754 = vadd.f32 %v650, %v722
        %v755 = vadd.f32 %v651, %v723
        %v756 = vadd.f32 %v652, %v724
        %v757 = vadd.f32 %v653, %v725
        %v758 = vadd.f32 %v654, %v726
        %v759 = vadd.f32 %v655, %v727
        %v760 = vadd.f32 %v656, %v728
        %v761 = vadd.f32 %v657, %v729
        %v762 = vadd.f32 %v658, %v730
        %v763 = vadd.f32 %v659, %v731
        %v764 = vadd.f32 %v660, %v732
        %v765 = vadd.f32 %v661, %v733
        %v766 = vadd.f32 %v662, %v734
        %v767 = vadd.f32 %v663, %v735
        %v768 = vadd.f32 %v664, %v736
        %v769 = vadd.f32 %v665, %v737
        %v770 = vadd.f32 %v666, %v738
        %v771 = vadd.f32 %v667, %v739
        %v772 = vadd.f32 %v668, %v740
        %v773 = vadd.f32 %v669, %v741
        %v774 = vadd.f32 %v670, %v742
        %v775 = vadd.f32 %v671, %v743
        %v776 = vadd.f32 %v672, %v744
        %v777 = vadd.f32 %v673, %v745
        %v778 = vld [vmem:[%s330 + $0x1] sm:$0xff]
        %v779 = vld [vmem:[%s330 + $0x9] sm:$0xff]
        %v780 = vld [vmem:[%s330 + $0x19] sm:$0xff]
        %v781 = vld [vmem:[%s330 + $0x21] sm:$0xff]
        %v782 = vld [vmem:[%s330 + $0x31] sm:$0xff]
        %v783 = vld [vmem:[%s330 + $0x39] sm:$0xff]
        %v784 = vld [vmem:[%s330 + $0x49] sm:$0xff]
        %v785 = vld [vmem:[%s330 + $0x51] sm:$0xff]
        %v786 = vld [vmem:[%s330 + $0x61] sm:$0xff]
        %v787 = vld [vmem:[%s330 + $0x69] sm:$0xff]
        %v788 = vld [vmem:[%s330 + $0x79] sm:$0xff]
        %v789 = vld [vmem:[%s330 + $0x81] sm:$0xff]
        %v790 = vld [vmem:[%s330 + $0x91] sm:$0xff]
        %v791 = vld [vmem:[%s330 + $0x99] sm:$0xff]
        %v792 = vld [vmem:[%s330 + $0xa9] sm:$0xff]
        %v793 = vld [vmem:[%s330 + $0xb1] sm:$0xff]
        %v794 = vld [vmem:[%s330 + $0xc1] sm:$0xff]
        %v795 = vld [vmem:[%s330 + $0xc9] sm:$0xff]
        %v796 = vld [vmem:[%s330 + $0xd9] sm:$0xff]
        %v797 = vld [vmem:[%s330 + $0xe1] sm:$0xff]
        %v798 = vld [vmem:[%s330 + $0xf1] sm:$0xff]
        %v799 = vld [vmem:[%s330 + $0xf9] sm:$0xff]
        %v800 = vld [vmem:[%s330 + $0x109] sm:$0xff]
        %v801 = vld [vmem:[%s330 + $0x111] sm:$0xff]
        %v802 = vld [vmem:[%s330 + $0x121] sm:$0xff]
        %v803 = vld [vmem:[%s330 + $0x129] sm:$0xff]
        %v804 = vld [vmem:[%s330 + $0x139] sm:$0xff]
        %v805 = vld [vmem:[%s330 + $0x141] sm:$0xff]
        %v806 = vld [vmem:[%s330 + $0x151] sm:$0xff]
        %v807 = vld [vmem:[%s330 + $0x159] sm:$0xff]
        %v808 = vld [vmem:[%s330 + $0x169] sm:$0xff]
        %v809 = vld [vmem:[%s330 + $0x171] sm:$0xff]
        %s810 = scalar_lea.vmem %s1, 4
        %v811 = vld [vmem:[%s810] sm:$0x1]
        %v813 = vlaneseq
        %v814 = vshrl.u32 %v813, 7
        %v815 = vsub.s32 0, %v814
        %v816 = vrot.slane %v811, %v815
        %v818 = vmul.f32 %v778, %v816
        %v819 = vmul.f32 %v779, %v816
        %v820 = vmul.f32 %v780, %v816
        %v821 = vmul.f32 %v781, %v816
        %v822 = vmul.f32 %v782, %v816
        %v823 = vmul.f32 %v783, %v816
        %v824 = vmul.f32 %v784, %v816
        %v825 = vmul.f32 %v785, %v816
        %v826 = vmul.f32 %v786, %v816
        %v827 = vmul.f32 %v787, %v816
        %v828 = vmul.f32 %v788, %v816
        %v829 = vmul.f32 %v789, %v816
        %v830 = vmul.f32 %v790, %v816
        %v831 = vmul.f32 %v791, %v816
        %v832 = vmul.f32 %v792, %v816
        %v833 = vmul.f32 %v793, %v816
        %v834 = vmul.f32 %v794, %v816
        %v835 = vmul.f32 %v795, %v816
        %v836 = vmul.f32 %v796, %v816
        %v837 = vmul.f32 %v797, %v816
        %v838 = vmul.f32 %v798, %v816
        %v839 = vmul.f32 %v799, %v816
        %v840 = vmul.f32 %v800, %v816
        %v841 = vmul.f32 %v801, %v816
        %v842 = vmul.f32 %v802, %v816
        %v843 = vmul.f32 %v803, %v816
        %v844 = vmul.f32 %v804, %v816
        %v845 = vmul.f32 %v805, %v816
        %v846 = vmul.f32 %v806, %v816
        %v847 = vmul.f32 %v807, %v816
        %v848 = vmul.f32 %v808, %v816
        %v849 = vmul.f32 %v809, %v816
        %v850 = vadd.f32 %v746, %v818
        %v851 = vadd.f32 %v747, %v819
        %v852 = vadd.f32 %v748, %v820
        %v853 = vadd.f32 %v749, %v821
        %v854 = vadd.f32 %v750, %v822
        %v855 = vadd.f32 %v751, %v823
        %v856 = vadd.f32 %v752, %v824
        %v857 = vadd.f32 %v753, %v825
        %v858 = vadd.f32 %v754, %v826
        %v859 = vadd.f32 %v755, %v827
        %v860 = vadd.f32 %v756, %v828
        %v861 = vadd.f32 %v757, %v829
        %v862 = vadd.f32 %v758, %v830
        %v863 = vadd.f32 %v759, %v831
        %v864 = vadd.f32 %v760, %v832
        %v865 = vadd.f32 %v761, %v833
        %v866 = vadd.f32 %v762, %v834
        %v867 = vadd.f32 %v763, %v835
        %v868 = vadd.f32 %v764, %v836
        %v869 = vadd.f32 %v765, %v837
        %v870 = vadd.f32 %v766, %v838
        %v871 = vadd.f32 %v767, %v839
        %v872 = vadd.f32 %v768, %v840
        %v873 = vadd.f32 %v769, %v841
        %v874 = vadd.f32 %v770, %v842
        %v875 = vadd.f32 %v771, %v843
        %v876 = vadd.f32 %v772, %v844
        %v877 = vadd.f32 %v773, %v845
        %v878 = vadd.f32 %v774, %v846
        %v879 = vadd.f32 %v775, %v847
        %v880 = vadd.f32 %v776, %v848
        %v881 = vadd.f32 %v777, %v849
        %v882 = vld [vmem:[%s330 + $0x2] sm:$0xff]
        %v883 = vld [vmem:[%s330 + $0xa] sm:$0xff]
        %v884 = vld [vmem:[%s330 + $0x1a] sm:$0xff]
        %v885 = vld [vmem:[%s330 + $0x22] sm:$0xff]
        %v886 = vld [vmem:[%s330 + $0x32] sm:$0xff]
        %v887 = vld [vmem:[%s330 + $0x3a] sm:$0xff]
        %v888 = vld [vmem:[%s330 + $0x4a] sm:$0xff]
        %v889 = vld [vmem:[%s330 + $0x52] sm:$0xff]
        %v890 = vld [vmem:[%s330 + $0x62] sm:$0xff]
        %v891 = vld [vmem:[%s330 + $0x6a] sm:$0xff]
        %v892 = vld [vmem:[%s330 + $0x7a] sm:$0xff]
        %v893 = vld [vmem:[%s330 + $0x82] sm:$0xff]
        %v894 = vld [vmem:[%s330 + $0x92] sm:$0xff]
        %v895 = vld [vmem:[%s330 + $0x9a] sm:$0xff]
        %v896 = vld [vmem:[%s330 + $0xaa] sm:$0xff]
        %v897 = vld [vmem:[%s330 + $0xb2] sm:$0xff]
        %v898 = vld [vmem:[%s330 + $0xc2] sm:$0xff]
        %v899 = vld [vmem:[%s330 + $0xca] sm:$0xff]
        %v900 = vld [vmem:[%s330 + $0xda] sm:$0xff]
        %v901 = vld [vmem:[%s330 + $0xe2] sm:$0xff]
        %v902 = vld [vmem:[%s330 + $0xf2] sm:$0xff]
        %v903 = vld [vmem:[%s330 + $0xfa] sm:$0xff]
        %v904 = vld [vmem:[%s330 + $0x10a] sm:$0xff]
        %v905 = vld [vmem:[%s330 + $0x112] sm:$0xff]
        %v906 = vld [vmem:[%s330 + $0x122] sm:$0xff]
        %v907 = vld [vmem:[%s330 + $0x12a] sm:$0xff]
        %v908 = vld [vmem:[%s330 + $0x13a] sm:$0xff]
        %v909 = vld [vmem:[%s330 + $0x142] sm:$0xff]
        %v910 = vld [vmem:[%s330 + $0x152] sm:$0xff]
        %v911 = vld [vmem:[%s330 + $0x15a] sm:$0xff]
        %v912 = vld [vmem:[%s330 + $0x16a] sm:$0xff]
        %v913 = vld [vmem:[%s330 + $0x172] sm:$0xff]
        %s914 = scalar_lea.vmem %s1, 5
        %v915 = vld [vmem:[%s914] sm:$0x1]
        %v917 = vlaneseq
        %v918 = vshrl.u32 %v917, 7
        %v919 = vsub.s32 0, %v918
        %v920 = vrot.slane %v915, %v919
        %v922 = vmul.f32 %v882, %v920
        %v923 = vmul.f32 %v883, %v920
        %v924 = vmul.f32 %v884, %v920
        %v925 = vmul.f32 %v885, %v920
        %v926 = vmul.f32 %v886, %v920
        %v927 = vmul.f32 %v887, %v920
        %v928 = vmul.f32 %v888, %v920
        %v929 = vmul.f32 %v889, %v920
        %v930 = vmul.f32 %v890, %v920
        %v931 = vmul.f32 %v891, %v920
        %v932 = vmul.f32 %v892, %v920
        %v933 = vmul.f32 %v893, %v920
        %v934 = vmul.f32 %v894, %v920
        %v935 = vmul.f32 %v895, %v920
        %v936 = vmul.f32 %v896, %v920
        %v937 = vmul.f32 %v897, %v920
        %v938 = vmul.f32 %v898, %v920
        %v939 = vmul.f32 %v899, %v920
        %v940 = vmul.f32 %v900, %v920
        %v941 = vmul.f32 %v901, %v920
        %v942 = vmul.f32 %v902, %v920
        %v943 = vmul.f32 %v903, %v920
        %v944 = vmul.f32 %v904, %v920
        %v945 = vmul.f32 %v905, %v920
        %v946 = vmul.f32 %v906, %v920
        %v947 = vmul.f32 %v907, %v920
        %v948 = vmul.f32 %v908, %v920
        %v949 = vmul.f32 %v909, %v920
        %v950 = vmul.f32 %v910, %v920
        %v951 = vmul.f32 %v911, %v920
        %v952 = vmul.f32 %v912, %v920
        %v953 = vmul.f32 %v913, %v920
        %v954 = vadd.f32 %v850, %v922
        %v955 = vadd.f32 %v851, %v923
        %v956 = vadd.f32 %v852, %v924
        %v957 = vadd.f32 %v853, %v925
        %v958 = vadd.f32 %v854, %v926
        %v959 = vadd.f32 %v855, %v927
        %v960 = vadd.f32 %v856, %v928
        %v961 = vadd.f32 %v857, %v929
        %v962 = vadd.f32 %v858, %v930
        %v963 = vadd.f32 %v859, %v931
        %v964 = vadd.f32 %v860, %v932
        %v965 = vadd.f32 %v861, %v933
        %v966 = vadd.f32 %v862, %v934
        %v967 = vadd.f32 %v863, %v935
        %v968 = vadd.f32 %v864, %v936
        %v969 = vadd.f32 %v865, %v937
        %v970 = vadd.f32 %v866, %v938
        %v971 = vadd.f32 %v867, %v939
        %v972 = vadd.f32 %v868, %v940
        %v973 = vadd.f32 %v869, %v941
        %v974 = vadd.f32 %v870, %v942
        %v975 = vadd.f32 %v871, %v943
        %v976 = vadd.f32 %v872, %v944
        %v977 = vadd.f32 %v873, %v945
        %v978 = vadd.f32 %v874, %v946
        %v979 = vadd.f32 %v875, %v947
        %v980 = vadd.f32 %v876, %v948
        %v981 = vadd.f32 %v877, %v949
        %v982 = vadd.f32 %v878, %v950
        %v983 = vadd.f32 %v879, %v951
        %v984 = vadd.f32 %v880, %v952
        %v985 = vadd.f32 %v881, %v953
        %s986 = scalar_lea.vmem [#allocation2], 48
        %v987 = vld [vmem:[%s986] sm:$0xff]
        %v988 = vld [vmem:[%s986 + $0x8] sm:$0xff]
        %v989 = vld [vmem:[%s986 + $0x18] sm:$0xff]
        %v990 = vld [vmem:[%s986 + $0x20] sm:$0xff]
        %v991 = vld [vmem:[%s986 + $0x30] sm:$0xff]
        %v992 = vld [vmem:[%s986 + $0x38] sm:$0xff]
        %v993 = vld [vmem:[%s986 + $0x48] sm:$0xff]
        %v994 = vld [vmem:[%s986 + $0x50] sm:$0xff]
        %v995 = vld [vmem:[%s986 + $0x60] sm:$0xff]
        %v996 = vld [vmem:[%s986 + $0x68] sm:$0xff]
        %v997 = vld [vmem:[%s986 + $0x78] sm:$0xff]
        %v998 = vld [vmem:[%s986 + $0x80] sm:$0xff]
        %v999 = vld [vmem:[%s986 + $0x90] sm:$0xff]
        %v1000 = vld [vmem:[%s986 + $0x98] sm:$0xff]
        %v1001 = vld [vmem:[%s986 + $0xa8] sm:$0xff]
        %v1002 = vld [vmem:[%s986 + $0xb0] sm:$0xff]
        %v1003 = vld [vmem:[%s986 + $0xc0] sm:$0xff]
        %v1004 = vld [vmem:[%s986 + $0xc8] sm:$0xff]
        %v1005 = vld [vmem:[%s986 + $0xd8] sm:$0xff]
        %v1006 = vld [vmem:[%s986 + $0xe0] sm:$0xff]
        %v1007 = vld [vmem:[%s986 + $0xf0] sm:$0xff]
        %v1008 = vld [vmem:[%s986 + $0xf8] sm:$0xff]
        %v1009 = vld [vmem:[%s986 + $0x108] sm:$0xff]
        %v1010 = vld [vmem:[%s986 + $0x110] sm:$0xff]
        %v1011 = vld [vmem:[%s986 + $0x120] sm:$0xff]
        %v1012 = vld [vmem:[%s986 + $0x128] sm:$0xff]
        %v1013 = vld [vmem:[%s986 + $0x138] sm:$0xff]
        %v1014 = vld [vmem:[%s986 + $0x140] sm:$0xff]
        %v1015 = vld [vmem:[%s986 + $0x150] sm:$0xff]
        %v1016 = vld [vmem:[%s986 + $0x158] sm:$0xff]
        %v1017 = vld [vmem:[%s986 + $0x168] sm:$0xff]
        %v1018 = vld [vmem:[%s986 + $0x170] sm:$0xff]
        %s1019 = scalar_lea.vmem %s1, 6
        %v1020 = vld [vmem:[%s1019] sm:$0x1]
        %v1022 = vlaneseq
        %v1023 = vshrl.u32 %v1022, 7
        %v1024 = vsub.s32 0, %v1023
        %v1025 = vrot.slane %v1020, %v1024
        %v1027 = vmul.f32 %v987, %v1025
        %v1028 = vmul.f32 %v988, %v1025
        %v1029 = vmul.f32 %v989, %v1025
        %v1030 = vmul.f32 %v990, %v1025
        %v1031 = vmul.f32 %v991, %v1025
        %v1032 = vmul.f32 %v992, %v1025
        %v1033 = vmul.f32 %v993, %v1025
        %v1034 = vmul.f32 %v994, %v1025
        %v1035 = vmul.f32 %v995, %v1025
        %v1036 = vmul.f32 %v996, %v1025
        %v1037 = vmul.f32 %v997, %v1025
        %v1038 = vmul.f32 %v998, %v1025
        %v1039 = vmul.f32 %v999, %v1025
        %v1040 = vmul.f32 %v1000, %v1025
        %v1041 = vmul.f32 %v1001, %v1025
        %v1042 = vmul.f32 %v1002, %v1025
        %v1043 = vmul.f32 %v1003, %v1025
        %v1044 = vmul.f32 %v1004, %v1025
        %v1045 = vmul.f32 %v1005, %v1025
        %v1046 = vmul.f32 %v1006, %v1025
        %v1047 = vmul.f32 %v1007, %v1025
        %v1048 = vmul.f32 %v1008, %v1025
        %v1049 = vmul.f32 %v1009, %v1025
        %v1050 = vmul.f32 %v1010, %v1025
        %v1051 = vmul.f32 %v1011, %v1025
        %v1052 = vmul.f32 %v1012, %v1025
        %v1053 = vmul.f32 %v1013, %v1025
        %v1054 = vmul.f32 %v1014, %v1025
        %v1055 = vmul.f32 %v1015, %v1025
        %v1056 = vmul.f32 %v1016, %v1025
        %v1057 = vmul.f32 %v1017, %v1025
        %v1058 = vmul.f32 %v1018, %v1025
        %v1059 = vadd.f32 %v954, %v1027
        %v1060 = vadd.f32 %v955, %v1028
        %v1061 = vadd.f32 %v956, %v1029
        %v1062 = vadd.f32 %v957, %v1030
        %v1063 = vadd.f32 %v958, %v1031
        %v1064 = vadd.f32 %v959, %v1032
        %v1065 = vadd.f32 %v960, %v1033
        %v1066 = vadd.f32 %v961, %v1034
        %v1067 = vadd.f32 %v962, %v1035
        %v1068 = vadd.f32 %v963, %v1036
        %v1069 = vadd.f32 %v964, %v1037
        %v1070 = vadd.f32 %v965, %v1038
        %v1071 = vadd.f32 %v966, %v1039
        %v1072 = vadd.f32 %v967, %v1040
        %v1073 = vadd.f32 %v968, %v1041
        %v1074 = vadd.f32 %v969, %v1042
        %v1075 = vadd.f32 %v970, %v1043
        %v1076 = vadd.f32 %v971, %v1044
        %v1077 = vadd.f32 %v972, %v1045
        %v1078 = vadd.f32 %v973, %v1046
        %v1079 = vadd.f32 %v974, %v1047
        %v1080 = vadd.f32 %v975, %v1048
        %v1081 = vadd.f32 %v976, %v1049
        %v1082 = vadd.f32 %v977, %v1050
        %v1083 = vadd.f32 %v978, %v1051
        %v1084 = vadd.f32 %v979, %v1052
        %v1085 = vadd.f32 %v980, %v1053
        %v1086 = vadd.f32 %v981, %v1054
        %v1087 = vadd.f32 %v982, %v1055
        %v1088 = vadd.f32 %v983, %v1056
        %v1089 = vadd.f32 %v984, %v1057
        %v1090 = vadd.f32 %v985, %v1058
        %v1091 = vld [vmem:[%s986 + $0x1] sm:$0xff]
        %v1092 = vld [vmem:[%s986 + $0x9] sm:$0xff]
        %v1093 = vld [vmem:[%s986 + $0x19] sm:$0xff]
        %v1094 = vld [vmem:[%s986 + $0x21] sm:$0xff]
        %v1095 = vld [vmem:[%s986 + $0x31] sm:$0xff]
        %v1096 = vld [vmem:[%s986 + $0x39] sm:$0xff]
        %v1097 = vld [vmem:[%s986 + $0x49] sm:$0xff]
        %v1098 = vld [vmem:[%s986 + $0x51] sm:$0xff]
        %v1099 = vld [vmem:[%s986 + $0x61] sm:$0xff]
        %v1100 = vld [vmem:[%s986 + $0x69] sm:$0xff]
        %v1101 = vld [vmem:[%s986 + $0x79] sm:$0xff]
        %v1102 = vld [vmem:[%s986 + $0x81] sm:$0xff]
        %v1103 = vld [vmem:[%s986 + $0x91] sm:$0xff]
        %v1104 = vld [vmem:[%s986 + $0x99] sm:$0xff]
        %v1105 = vld [vmem:[%s986 + $0xa9] sm:$0xff]
        %v1106 = vld [vmem:[%s986 + $0xb1] sm:$0xff]
        %v1107 = vld [vmem:[%s986 + $0xc1] sm:$0xff]
        %v1108 = vld [vmem:[%s986 + $0xc9] sm:$0xff]
        %v1109 = vld [vmem:[%s986 + $0xd9] sm:$0xff]
        %v1110 = vld [vmem:[%s986 + $0xe1] sm:$0xff]
        %v1111 = vld [vmem:[%s986 + $0xf1] sm:$0xff]
        %v1112 = vld [vmem:[%s986 + $0xf9] sm:$0xff]
        %v1113 = vld [vmem:[%s986 + $0x109] sm:$0xff]
        %v1114 = vld [vmem:[%s986 + $0x111] sm:$0xff]
        %v1115 = vld [vmem:[%s986 + $0x121] sm:$0xff]
        %v1116 = vld [vmem:[%s986 + $0x129] sm:$0xff]
        %v1117 = vld [vmem:[%s986 + $0x139] sm:$0xff]
        %v1118 = vld [vmem:[%s986 + $0x141] sm:$0xff]
        %v1119 = vld [vmem:[%s986 + $0x151] sm:$0xff]
        %v1120 = vld [vmem:[%s986 + $0x159] sm:$0xff]
        %v1121 = vld [vmem:[%s986 + $0x169] sm:$0xff]
        %v1122 = vld [vmem:[%s986 + $0x171] sm:$0xff]
        %s1123 = scalar_lea.vmem %s1, 7
        %v1124 = vld [vmem:[%s1123] sm:$0x1]
        %v1126 = vlaneseq
        %v1127 = vshrl.u32 %v1126, 7
        %v1128 = vsub.s32 0, %v1127
        %v1129 = vrot.slane %v1124, %v1128
        %v1131 = vmul.f32 %v1091, %v1129
        %v1132 = vmul.f32 %v1092, %v1129
        %v1133 = vmul.f32 %v1093, %v1129
        %v1134 = vmul.f32 %v1094, %v1129
        %v1135 = vmul.f32 %v1095, %v1129
        %v1136 = vmul.f32 %v1096, %v1129
        %v1137 = vmul.f32 %v1097, %v1129
        %v1138 = vmul.f32 %v1098, %v1129
        %v1139 = vmul.f32 %v1099, %v1129
        %v1140 = vmul.f32 %v1100, %v1129
        %v1141 = vmul.f32 %v1101, %v1129
        %v1142 = vmul.f32 %v1102, %v1129
        %v1143 = vmul.f32 %v1103, %v1129
        %v1144 = vmul.f32 %v1104, %v1129
        %v1145 = vmul.f32 %v1105, %v1129
        %v1146 = vmul.f32 %v1106, %v1129
        %v1147 = vmul.f32 %v1107, %v1129
        %v1148 = vmul.f32 %v1108, %v1129
        %v1149 = vmul.f32 %v1109, %v1129
        %v1150 = vmul.f32 %v1110, %v1129
        %v1151 = vmul.f32 %v1111, %v1129
        %v1152 = vmul.f32 %v1112, %v1129
        %v1153 = vmul.f32 %v1113, %v1129
        %v1154 = vmul.f32 %v1114, %v1129
        %v1155 = vmul.f32 %v1115, %v1129
        %v1156 = vmul.f32 %v1116, %v1129
        %v1157 = vmul.f32 %v1117, %v1129
        %v1158 = vmul.f32 %v1118, %v1129
        %v1159 = vmul.f32 %v1119, %v1129
        %v1160 = vmul.f32 %v1120, %v1129
        %v1161 = vmul.f32 %v1121, %v1129
        %v1162 = vmul.f32 %v1122, %v1129
        %v1163 = vadd.f32 %v1059, %v1131
        %v1164 = vadd.f32 %v1060, %v1132
        %v1165 = vadd.f32 %v1061, %v1133
        %v1166 = vadd.f32 %v1062, %v1134
        %v1167 = vadd.f32 %v1063, %v1135
        %v1168 = vadd.f32 %v1064, %v1136
        %v1169 = vadd.f32 %v1065, %v1137
        %v1170 = vadd.f32 %v1066, %v1138
        %v1171 = vadd.f32 %v1067, %v1139
        %v1172 = vadd.f32 %v1068, %v1140
        %v1173 = vadd.f32 %v1069, %v1141
        %v1174 = vadd.f32 %v1070, %v1142
        %v1175 = vadd.f32 %v1071, %v1143
        %v1176 = vadd.f32 %v1072, %v1144
        %v1177 = vadd.f32 %v1073, %v1145
        %v1178 = vadd.f32 %v1074, %v1146
        %v1179 = vadd.f32 %v1075, %v1147
        %v1180 = vadd.f32 %v1076, %v1148
        %v1181 = vadd.f32 %v1077, %v1149
        %v1182 = vadd.f32 %v1078, %v1150
        %v1183 = vadd.f32 %v1079, %v1151
        %v1184 = vadd.f32 %v1080, %v1152
        %v1185 = vadd.f32 %v1081, %v1153
        %v1186 = vadd.f32 %v1082, %v1154
        %v1187 = vadd.f32 %v1083, %v1155
        %v1188 = vadd.f32 %v1084, %v1156
        %v1189 = vadd.f32 %v1085, %v1157
        %v1190 = vadd.f32 %v1086, %v1158
        %v1191 = vadd.f32 %v1087, %v1159
        %v1192 = vadd.f32 %v1088, %v1160
        %v1193 = vadd.f32 %v1089, %v1161
        %v1194 = vadd.f32 %v1090, %v1162
        %v1195 = vld [vmem:[%s986 + $0x2] sm:$0xff]
        %v1196 = vld [vmem:[%s986 + $0xa] sm:$0xff]
        %v1197 = vld [vmem:[%s986 + $0x1a] sm:$0xff]
        %v1198 = vld [vmem:[%s986 + $0x22] sm:$0xff]
        %v1199 = vld [vmem:[%s986 + $0x32] sm:$0xff]
        %v1200 = vld [vmem:[%s986 + $0x3a] sm:$0xff]
        %v1201 = vld [vmem:[%s986 + $0x4a] sm:$0xff]
        %v1202 = vld [vmem:[%s986 + $0x52] sm:$0xff]
        %v1203 = vld [vmem:[%s986 + $0x62] sm:$0xff]
        %v1204 = vld [vmem:[%s986 + $0x6a] sm:$0xff]
        %v1205 = vld [vmem:[%s986 + $0x7a] sm:$0xff]
        %v1206 = vld [vmem:[%s986 + $0x82] sm:$0xff]
        %v1207 = vld [vmem:[%s986 + $0x92] sm:$0xff]
        %v1208 = vld [vmem:[%s986 + $0x9a] sm:$0xff]
        %v1209 = vld [vmem:[%s986 + $0xaa] sm:$0xff]
        %v1210 = vld [vmem:[%s986 + $0xb2] sm:$0xff]
        %v1211 = vld [vmem:[%s986 + $0xc2] sm:$0xff]
        %v1212 = vld [vmem:[%s986 + $0xca] sm:$0xff]
        %v1213 = vld [vmem:[%s986 + $0xda] sm:$0xff]
        %v1214 = vld [vmem:[%s986 + $0xe2] sm:$0xff]
        %v1215 = vld [vmem:[%s986 + $0xf2] sm:$0xff]
        %v1216 = vld [vmem:[%s986 + $0xfa] sm:$0xff]
        %v1217 = vld [vmem:[%s986 + $0x10a] sm:$0xff]
        %v1218 = vld [vmem:[%s986 + $0x112] sm:$0xff]
        %v1219 = vld [vmem:[%s986 + $0x122] sm:$0xff]
        %v1220 = vld [vmem:[%s986 + $0x12a] sm:$0xff]
        %v1221 = vld [vmem:[%s986 + $0x13a] sm:$0xff]
        %v1222 = vld [vmem:[%s986 + $0x142] sm:$0xff]
        %v1223 = vld [vmem:[%s986 + $0x152] sm:$0xff]
        %v1224 = vld [vmem:[%s986 + $0x15a] sm:$0xff]
        %v1225 = vld [vmem:[%s986 + $0x16a] sm:$0xff]
        %v1226 = vld [vmem:[%s986 + $0x172] sm:$0xff]
        %s1227 = scalar_lea.vmem %s1, 8
        %v1228 = vld [vmem:[%s1227] sm:$0x1]
        %v1230 = vlaneseq
        %v1231 = vshrl.u32 %v1230, 7
        %v1232 = vsub.s32 0, %v1231
        %v1233 = vrot.slane %v1228, %v1232
        %v1235 = vmul.f32 %v1195, %v1233
        %v1236 = vmul.f32 %v1196, %v1233
        %v1237 = vmul.f32 %v1197, %v1233
        %v1238 = vmul.f32 %v1198, %v1233
        %v1239 = vmul.f32 %v1199, %v1233
        %v1240 = vmul.f32 %v1200, %v1233
        %v1241 = vmul.f32 %v1201, %v1233
        %v1242 = vmul.f32 %v1202, %v1233
        %v1243 = vmul.f32 %v1203, %v1233
        %v1244 = vmul.f32 %v1204, %v1233
        %v1245 = vmul.f32 %v1205, %v1233
        %v1246 = vmul.f32 %v1206, %v1233
        %v1247 = vmul.f32 %v1207, %v1233
        %v1248 = vmul.f32 %v1208, %v1233
        %v1249 = vmul.f32 %v1209, %v1233
        %v1250 = vmul.f32 %v1210, %v1233
        %v1251 = vmul.f32 %v1211, %v1233
        %v1252 = vmul.f32 %v1212, %v1233
        %v1253 = vmul.f32 %v1213, %v1233
        %v1254 = vmul.f32 %v1214, %v1233
        %v1255 = vmul.f32 %v1215, %v1233
        %v1256 = vmul.f32 %v1216, %v1233
        %v1257 = vmul.f32 %v1217, %v1233
        %v1258 = vmul.f32 %v1218, %v1233
        %v1259 = vmul.f32 %v1219, %v1233
        %v1260 = vmul.f32 %v1220, %v1233
        %v1261 = vmul.f32 %v1221, %v1233
        %v1262 = vmul.f32 %v1222, %v1233
        %v1263 = vmul.f32 %v1223, %v1233
        %v1264 = vmul.f32 %v1224, %v1233
        %v1265 = vmul.f32 %v1225, %v1233
        %v1266 = vmul.f32 %v1226, %v1233
        %v1267 = vadd.f32 %v1163, %v1235
        %v1268 = vadd.f32 %v1164, %v1236
        %v1269 = vadd.f32 %v1165, %v1237
        %v1270 = vadd.f32 %v1166, %v1238
        %v1271 = vadd.f32 %v1167, %v1239
        %v1272 = vadd.f32 %v1168, %v1240
        %v1273 = vadd.f32 %v1169, %v1241
        %v1274 = vadd.f32 %v1170, %v1242
        %v1275 = vadd.f32 %v1171, %v1243
        %v1276 = vadd.f32 %v1172, %v1244
        %v1277 = vadd.f32 %v1173, %v1245
        %v1278 = vadd.f32 %v1174, %v1246
        %v1279 = vadd.f32 %v1175, %v1247
        %v1280 = vadd.f32 %v1176, %v1248
        %v1281 = vadd.f32 %v1177, %v1249
        %v1282 = vadd.f32 %v1178, %v1250
        %v1283 = vadd.f32 %v1179, %v1251
        %v1284 = vadd.f32 %v1180, %v1252
        %v1285 = vadd.f32 %v1181, %v1253
        %v1286 = vadd.f32 %v1182, %v1254
        %v1287 = vadd.f32 %v1183, %v1255
        %v1288 = vadd.f32 %v1184, %v1256
        %v1289 = vadd.f32 %v1185, %v1257
        %v1290 = vadd.f32 %v1186, %v1258
        %v1291 = vadd.f32 %v1187, %v1259
        %v1292 = vadd.f32 %v1188, %v1260
        %v1293 = vadd.f32 %v1189, %v1261
        %v1294 = vadd.f32 %v1190, %v1262
        %v1295 = vadd.f32 %v1191, %v1263
        %v1296 = vadd.f32 %v1192, %v1264
        %v1297 = vadd.f32 %v1193, %v1265
        %v1298 = vadd.f32 %v1194, %v1266
        %v1299 = vpack.c.bf16 %v1268, %v1267
        %v1300 = vpack.c.bf16 %v1270, %v1269
        %v1301 = vpack.c.bf16 %v1272, %v1271
        %v1302 = vpack.c.bf16 %v1274, %v1273
        %v1303 = vpack.c.bf16 %v1276, %v1275
        %v1304 = vpack.c.bf16 %v1278, %v1277
        %v1305 = vpack.c.bf16 %v1280, %v1279
        %v1306 = vpack.c.bf16 %v1282, %v1281
        %v1307 = vpack.c.bf16 %v1284, %v1283
        %v1308 = vpack.c.bf16 %v1286, %v1285
        %v1309 = vpack.c.bf16 %v1288, %v1287
        %v1310 = vpack.c.bf16 %v1290, %v1289
        %v1311 = vpack.c.bf16 %v1292, %v1291
        %v1312 = vpack.c.bf16 %v1294, %v1293
        %v1313 = vpack.c.bf16 %v1296, %v1295
        %v1314 = vpack.c.bf16 %v1298, %v1297
        %v1315 = vld [vmem:[%s2] sm:$0xf]
        %v1316 = vld [vmem:[%s2 + $0x4] sm:$0xf]
        %v1317 = vld [vmem:[%s2 + $0x8] sm:$0xf]
        %v1318 = vld [vmem:[%s2 + $0xc] sm:$0xf]
        %v1319 = vld [vmem:[%s2 + $0x10] sm:$0xf]
        %v1320 = vld [vmem:[%s2 + $0x14] sm:$0xf]
        %v1321 = vld [vmem:[%s2 + $0x18] sm:$0xf]
        %v1322 = vld [vmem:[%s2 + $0x1c] sm:$0xf]
        %v1323 = vld [vmem:[%s2 + $0x20] sm:$0xf]
        %v1324 = vld [vmem:[%s2 + $0x24] sm:$0xf]
        %v1325 = vld [vmem:[%s2 + $0x28] sm:$0xf]
        %v1326 = vld [vmem:[%s2 + $0x2c] sm:$0xf]
        %v1327 = vld [vmem:[%s2 + $0x30] sm:$0xf]
        %v1328 = vld [vmem:[%s2 + $0x34] sm:$0xf]
        %v1329 = vld [vmem:[%s2 + $0x38] sm:$0xf]
        %v1330 = vld [vmem:[%s2 + $0x3c] sm:$0xf]
        %v1347 = vunpack.c.l.b16 %v1315
        %v1348 = vunpack.c.l.b16 %v1316
        %v1349 = vunpack.c.l.b16 %v1317
        %v1350 = vunpack.c.l.b16 %v1318
        %v1351 = vunpack.c.l.b16 %v1319
        %v1352 = vunpack.c.l.b16 %v1320
        %v1353 = vunpack.c.l.b16 %v1321
        %v1354 = vunpack.c.l.b16 %v1322
        %v1355 = vunpack.c.l.b16 %v1323
        %v1356 = vunpack.c.l.b16 %v1324
        %v1357 = vunpack.c.l.b16 %v1325
        %v1358 = vunpack.c.l.b16 %v1326
        %v1359 = vunpack.c.l.b16 %v1327
        %v1360 = vunpack.c.l.b16 %v1328
        %v1361 = vunpack.c.l.b16 %v1329
        %v1362 = vunpack.c.l.b16 %v1330
        %v1363 = vpack.c.b16 %v1348, %v1347
        %v1364 = vpack.c.b16 %v1350, %v1349
        %v1365 = vpack.c.b16 %v1352, %v1351
        %v1366 = vpack.c.b16 %v1354, %v1353
        %v1367 = vpack.c.b16 %v1356, %v1355
        %v1368 = vpack.c.b16 %v1358, %v1357
        %v1369 = vpack.c.b16 %v1360, %v1359
        %v1370 = vpack.c.b16 %v1362, %v1361
        %1379 = vmatprep.subr.bf16.mxu0 0
        %1380 = vmatpush1.bf16.msra.mxu0 %v1363
        %1381 = vmatprep.subr.bf16.mxu0 0
        %1382 = vmatpush1.bf16.msra.mxu0 %v1364
        %1383 = vmatprep.subr.bf16.mxu0 0
        %1384 = vmatpush1.bf16.msra.mxu0 %v1365
        %1385 = vmatprep.subr.bf16.mxu0 0
        %1386 = vmatpush1.bf16.msra.mxu0 %v1366
        %1387 = vmatprep.subr.bf16.mxu0 0
        %1388 = vmatpush1.bf16.msra.mxu0 %v1367
        %1389 = vmatprep.subr.bf16.mxu0 0
        %1390 = vmatpush1.bf16.msra.mxu0 %v1368
        %1391 = vmatprep.subr.bf16.mxu0 0
        %1392 = vmatpush1.bf16.msra.mxu0 %v1369
        %1393 = vmatprep.subr.bf16.mxu0 0
        %1394 = vmatpush1.bf16.msra.mxu0 %v1370
        %1395 = vmatprep.subr.bf16.mxu0 0
        %1396 = vmatpush1.bf16.msra.mxu0 0
        %1397 = vmatprep.subr.bf16.mxu0 0
        %1398 = vmatpush1.bf16.msra.mxu0 0
        %1399 = vmatprep.subr.bf16.mxu0 0
        %1400 = vmatpush1.bf16.msra.mxu0 0
        %1401 = vmatprep.subr.bf16.mxu0 0
        %1402 = vmatpush1.bf16.msra.mxu0 0
        %1403 = vmatprep.subr.bf16.mxu0 0
        %1404 = vmatpush1.bf16.msra.mxu0 0
        %1405 = vmatprep.subr.bf16.mxu0 0
        %1406 = vmatpush1.bf16.msra.mxu0 0
        %1407 = vmatprep.subr.bf16.mxu0 0
        %1408 = vmatpush1.bf16.msra.mxu0 0
        %1409 = vmatprep.subr.bf16.mxu0 0
        %1410 = vmatpush1.bf16.msra.mxu0 0
        %1411 = vmatprep.mubr.bf16.mxu0 0
        %1412 = vmatmul.mubr.bf16.gmra.mrb[0].mxu0 %v1299
        %v1413 = vpop.f32.mrb[0].mxu0
        %v1414 = vadd.f32 0.0, %v1413
        %v1415 = vpop.f32.mrb[0].mxu0
        %v1416 = vpop.f32.mrb[0].mxu0
        %v1417 = vadd.f32 0.0, %v1416
        %v1418 = vpop.f32.mrb[0].mxu0
        %1419 = vmatprep.mubr.bf16.mxu0 0
        %1420 = vmatmul.mubr.bf16.gmra.mrb[0].mxu0 %v1300
        %v1421 = vpop.f32.mrb[0].mxu0
        %v1422 = vadd.f32 0.0, %v1421
        %v1423 = vpop.f32.mrb[0].mxu0
        %v1424 = vpop.f32.mrb[0].mxu0
        %v1425 = vadd.f32 0.0, %v1424
        %v1426 = vpop.f32.mrb[0].mxu0
        %1427 = vmatprep.mubr.bf16.mxu0 0
        %1428 = vmatmul.mubr.bf16.gmra.mrb[0].mxu0 %v1301
        %v1429 = vpop.f32.mrb[0].mxu0
        %v1430 = vadd.f32 0.0, %v1429
        %v1431 = vpop.f32.mrb[0].mxu0
        %v1432 = vpop.f32.mrb[0].mxu0
        %v1433 = vadd.f32 0.0, %v1432
        %v1434 = vpop.f32.mrb[0].mxu0
        %1435 = vmatprep.mubr.bf16.mxu0 0
        %1436 = vmatmul.mubr.bf16.gmra.mrb[0].mxu0 %v1302
        %v1437 = vpop.f32.mrb[0].mxu0
        %v1438 = vadd.f32 0.0, %v1437
        %v1439 = vpop.f32.mrb[0].mxu0
        %v1440 = vpop.f32.mrb[0].mxu0
        %v1441 = vadd.f32 0.0, %v1440
        %v1442 = vpop.f32.mrb[0].mxu0
        %1443 = vmatprep.mubr.bf16.mxu0 0
        %1444 = vmatmul.mubr.bf16.gmra.mrb[0].mxu0 %v1303
        %v1445 = vpop.f32.mrb[0].mxu0
        %v1446 = vadd.f32 0.0, %v1445
        %v1447 = vpop.f32.mrb[0].mxu0
        %v1448 = vpop.f32.mrb[0].mxu0
        %v1449 = vadd.f32 0.0, %v1448
        %v1450 = vpop.f32.mrb[0].mxu0
        %1451 = vmatprep.mubr.bf16.mxu0 0
        %1452 = vmatmul.mubr.bf16.gmra.mrb[0].mxu0 %v1304
        %v1453 = vpop.f32.mrb[0].mxu0
        %v1454 = vadd.f32 0.0, %v1453
        %v1455 = vpop.f32.mrb[0].mxu0
        %v1456 = vpop.f32.mrb[0].mxu0
        %v1457 = vadd.f32 0.0, %v1456
        %v1458 = vpop.f32.mrb[0].mxu0
        %1459 = vmatprep.mubr.bf16.mxu0 0
        %1460 = vmatmul.mubr.bf16.gmra.mrb[0].mxu0 %v1305
        %v1461 = vpop.f32.mrb[0].mxu0
        %v1462 = vadd.f32 0.0, %v1461
        %v1463 = vpop.f32.mrb[0].mxu0
        %v1464 = vpop.f32.mrb[0].mxu0
        %v1465 = vadd.f32 0.0, %v1464
        %v1466 = vpop.f32.mrb[0].mxu0
        %1467 = vmatprep.mubr.bf16.mxu0 0
        %1468 = vmatmul.mubr.bf16.gmra.mrb[0].mxu0 %v1306
        %v1469 = vpop.f32.mrb[0].mxu0
        %v1470 = vadd.f32 0.0, %v1469
        %v1471 = vpop.f32.mrb[0].mxu0
        %v1472 = vpop.f32.mrb[0].mxu0
        %v1473 = vadd.f32 0.0, %v1472
        %v1474 = vpop.f32.mrb[0].mxu0
        %1475 = vmatprep.mubr.bf16.mxu0 0
        %1476 = vmatmul.mubr.bf16.gmra.mrb[0].mxu0 %v1307
        %v1477 = vpop.f32.mrb[0].mxu0
        %v1478 = vadd.f32 0.0, %v1477
        %v1479 = vpop.f32.mrb[0].mxu0
        %v1480 = vpop.f32.mrb[0].mxu0
        %v1481 = vadd.f32 0.0, %v1480
        %v1482 = vpop.f32.mrb[0].mxu0
        %1483 = vmatprep.mubr.bf16.mxu0 0
        %1484 = vmatmul.mubr.bf16.gmra.mrb[0].mxu0 %v1308
        %v1485 = vpop.f32.mrb[0].mxu0
        %v1486 = vadd.f32 0.0, %v1485
        %v1487 = vpop.f32.mrb[0].mxu0
        %v1488 = vpop.f32.mrb[0].mxu0
        %v1489 = vadd.f32 0.0, %v1488
        %v1490 = vpop.f32.mrb[0].mxu0
        %1491 = vmatprep.mubr.bf16.mxu0 0
        %1492 = vmatmul.mubr.bf16.gmra.mrb[0].mxu0 %v1309
        %v1493 = vpop.f32.mrb[0].mxu0
        %v1494 = vadd.f32 0.0, %v1493
        %v1495 = vpop.f32.mrb[0].mxu0
        %v1496 = vpop.f32.mrb[0].mxu0
        %v1497 = vadd.f32 0.0, %v1496
        %v1498 = vpop.f32.mrb[0].mxu0
        %1499 = vmatprep.mubr.bf16.mxu0 0
        %1500 = vmatmul.mubr.bf16.gmra.mrb[0].mxu0 %v1310
        %v1501 = vpop.f32.mrb[0].mxu0
        %v1502 = vadd.f32 0.0, %v1501
        %v1503 = vpop.f32.mrb[0].mxu0
        %v1504 = vpop.f32.mrb[0].mxu0
        %v1505 = vadd.f32 0.0, %v1504
        %v1506 = vpop.f32.mrb[0].mxu0
        %1507 = vmatprep.mubr.bf16.mxu0 0
        %1508 = vmatmul.mubr.bf16.gmra.mrb[0].mxu0 %v1311
        %v1509 = vpop.f32.mrb[0].mxu0
        %v1510 = vadd.f32 0.0, %v1509
        %v1511 = vpop.f32.mrb[0].mxu0
        %v1512 = vpop.f32.mrb[0].mxu0
        %v1513 = vadd.f32 0.0, %v1512
        %v1514 = vpop.f32.mrb[0].mxu0
        %1515 = vmatprep.mubr.bf16.mxu0 0
        %1516 = vmatmul.mubr.bf16.gmra.mrb[0].mxu0 %v1312
        %v1517 = vpop.f32.mrb[0].mxu0
        %v1518 = vadd.f32 0.0, %v1517
        %v1519 = vpop.f32.mrb[0].mxu0
        %v1520 = vpop.f32.mrb[0].mxu0
        %v1521 = vadd.f32 0.0, %v1520
        %v1522 = vpop.f32.mrb[0].mxu0
        %1523 = vmatprep.mubr.bf16.mxu0 0
        %1524 = vmatmul.mubr.bf16.gmra.mrb[0].mxu0 %v1313
        %v1525 = vpop.f32.mrb[0].mxu0
        %v1526 = vadd.f32 0.0, %v1525
        %v1527 = vpop.f32.mrb[0].mxu0
        %v1528 = vpop.f32.mrb[0].mxu0
        %v1529 = vadd.f32 0.0, %v1528
        %v1530 = vpop.f32.mrb[0].mxu0
        %1531 = vmatprep.mubr.bf16.mxu0 0
        %1532 = vmatmul.mubr.bf16.gmra.mrb[0].mxu0 %v1314
        %v1533 = vpop.f32.mrb[0].mxu0
        %v1534 = vadd.f32 0.0, %v1533
        %v1535 = vpop.f32.mrb[0].mxu0
        %v1536 = vpop.f32.mrb[0].mxu0
        %v1537 = vadd.f32 0.0, %v1536
        %v1538 = vpop.f32.mrb[0].mxu0
        %1539 = vdwg.mxu0
        %v1540 = vld [vmem:[%s3] sm:$0x1]
        %v1542 = vlaneseq
        %v1543 = vshrl.u32 %v1542, 7
        %v1544 = vsub.s32 0, %v1543
        %v1545 = vrot.slane %v1540, %v1544
        %v1547 = vmul.f32 %v1414, %v1545
        %v1548 = vmul.f32 %v1417, %v1545
        %v1549 = vmul.f32 %v1422, %v1545
        %v1550 = vmul.f32 %v1425, %v1545
        %v1551 = vmul.f32 %v1430, %v1545
        %v1552 = vmul.f32 %v1433, %v1545
        %v1553 = vmul.f32 %v1438, %v1545
        %v1554 = vmul.f32 %v1441, %v1545
        %v1555 = vmul.f32 %v1446, %v1545
        %v1556 = vmul.f32 %v1449, %v1545
        %v1557 = vmul.f32 %v1454, %v1545
        %v1558 = vmul.f32 %v1457, %v1545
        %v1559 = vmul.f32 %v1462, %v1545
        %v1560 = vmul.f32 %v1465, %v1545
        %v1561 = vmul.f32 %v1470, %v1545
        %v1562 = vmul.f32 %v1473, %v1545
        %v1563 = vmul.f32 %v1478, %v1545
        %v1564 = vmul.f32 %v1481, %v1545
        %v1565 = vmul.f32 %v1486, %v1545
        %v1566 = vmul.f32 %v1489, %v1545
        %v1567 = vmul.f32 %v1494, %v1545
        %v1568 = vmul.f32 %v1497, %v1545
        %v1569 = vmul.f32 %v1502, %v1545
        %v1570 = vmul.f32 %v1505, %v1545
        %v1571 = vmul.f32 %v1510, %v1545
        %v1572 = vmul.f32 %v1513, %v1545
        %v1573 = vmul.f32 %v1518, %v1545
        %v1574 = vmul.f32 %v1521, %v1545
        %v1575 = vmul.f32 %v1526, %v1545
        %v1576 = vmul.f32 %v1529, %v1545
        %v1577 = vmul.f32 %v1534, %v1545
        %v1578 = vmul.f32 %v1537, %v1545
        %v1579 = vld [vmem:[%s4] sm:$0x1]
        %v1581 = vlaneseq
        %v1582 = vshrl.u32 %v1581, 7
        %v1583 = vsub.s32 0, %v1582
        %v1584 = vrot.slane %v1579, %v1583
        %v1586 = vadd.f32 %v1547, %v1584
        %v1587 = vadd.f32 %v1548, %v1584
        %v1588 = vadd.f32 %v1549, %v1584
        %v1589 = vadd.f32 %v1550, %v1584
        %v1590 = vadd.f32 %v1551, %v1584
        %v1591 = vadd.f32 %v1552, %v1584
        %v1592 = vadd.f32 %v1553, %v1584
        %v1593 = vadd.f32 %v1554, %v1584
        %v1594 = vadd.f32 %v1555, %v1584
        %v1595 = vadd.f32 %v1556, %v1584
        %v1596 = vadd.f32 %v1557, %v1584
        %v1597 = vadd.f32 %v1558, %v1584
        %v1598 = vadd.f32 %v1559, %v1584
        %v1599 = vadd.f32 %v1560, %v1584
        %v1600 = vadd.f32 %v1561, %v1584
        %v1601 = vadd.f32 %v1562, %v1584
        %v1602 = vadd.f32 %v1563, %v1584
        %v1603 = vadd.f32 %v1564, %v1584
        %v1604 = vadd.f32 %v1565, %v1584
        %v1605 = vadd.f32 %v1566, %v1584
        %v1606 = vadd.f32 %v1567, %v1584
        %v1607 = vadd.f32 %v1568, %v1584
        %v1608 = vadd.f32 %v1569, %v1584
        %v1609 = vadd.f32 %v1570, %v1584
        %v1610 = vadd.f32 %v1571, %v1584
        %v1611 = vadd.f32 %v1572, %v1584
        %v1612 = vadd.f32 %v1573, %v1584
        %v1613 = vadd.f32 %v1574, %v1584
        %v1614 = vadd.f32 %v1575, %v1584
        %v1615 = vadd.f32 %v1576, %v1584
        %v1616 = vadd.f32 %v1577, %v1584
        %v1617 = vadd.f32 %v1578, %v1584
        %v1618 = vadd.f32 %v1586, 3.0
        %v1619 = vadd.f32 %v1587, 3.0
        %v1620 = vadd.f32 %v1588, 3.0
        %v1621 = vadd.f32 %v1589, 3.0
        %v1622 = vadd.f32 %v1590, 3.0
        %v1623 = vadd.f32 %v1591, 3.0
        %v1624 = vadd.f32 %v1592, 3.0
        %v1625 = vadd.f32 %v1593, 3.0
        %v1626 = vadd.f32 %v1594, 3.0
        %v1627 = vadd.f32 %v1595, 3.0
        %v1628 = vadd.f32 %v1596, 3.0
        %v1629 = vadd.f32 %v1597, 3.0
        %v1630 = vadd.f32 %v1598, 3.0
        %v1631 = vadd.f32 %v1599, 3.0
        %v1632 = vadd.f32 %v1600, 3.0
        %v1633 = vadd.f32 %v1601, 3.0
        %v1634 = vadd.f32 %v1602, 3.0
        %v1635 = vadd.f32 %v1603, 3.0
        %v1636 = vadd.f32 %v1604, 3.0
        %v1637 = vadd.f32 %v1605, 3.0
        %v1638 = vadd.f32 %v1606, 3.0
        %v1639 = vadd.f32 %v1607, 3.0
        %v1640 = vadd.f32 %v1608, 3.0
        %v1641 = vadd.f32 %v1609, 3.0
        %v1642 = vadd.f32 %v1610, 3.0
        %v1643 = vadd.f32 %v1611, 3.0
        %v1644 = vadd.f32 %v1612, 3.0
        %v1645 = vadd.f32 %v1613, 3.0
        %v1646 = vadd.f32 %v1614, 3.0
        %v1647 = vadd.f32 %v1615, 3.0
        %v1648 = vadd.f32 %v1616, 3.0
        %v1649 = vadd.f32 %v1617, 3.0
        %v1650 = vmax.f32 %v1618, 0.0
        %v1651 = vmax.f32 %v1619, 0.0
        %v1652 = vmax.f32 %v1620, 0.0
        %v1653 = vmax.f32 %v1621, 0.0
        %v1654 = vmax.f32 %v1622, 0.0
        %v1655 = vmax.f32 %v1623, 0.0
        %v1656 = vmax.f32 %v1624, 0.0
        %v1657 = vmax.f32 %v1625, 0.0
        %v1658 = vmax.f32 %v1626, 0.0
        %v1659 = vmax.f32 %v1627, 0.0
        %v1660 = vmax.f32 %v1628, 0.0
        %v1661 = vmax.f32 %v1629, 0.0
        %v1662 = vmax.f32 %v1630, 0.0
        %v1663 = vmax.f32 %v1631, 0.0
        %v1664 = vmax.f32 %v1632, 0.0
        %v1665 = vmax.f32 %v1633, 0.0
        %v1666 = vmax.f32 %v1634, 0.0
        %v1667 = vmax.f32 %v1635, 0.0
        %v1668 = vmax.f32 %v1636, 0.0
        %v1669 = vmax.f32 %v1637, 0.0
        %v1670 = vmax.f32 %v1638, 0.0
        %v1671 = vmax.f32 %v1639, 0.0
        %v1672 = vmax.f32 %v1640, 0.0
        %v1673 = vmax.f32 %v1641, 0.0
        %v1674 = vmax.f32 %v1642, 0.0
        %v1675 = vmax.f32 %v1643, 0.0
        %v1676 = vmax.f32 %v1644, 0.0
        %v1677 = vmax.f32 %v1645, 0.0
        %v1678 = vmax.f32 %v1646, 0.0
        %v1679 = vmax.f32 %v1647, 0.0
        %v1680 = vmax.f32 %v1648, 0.0
        %v1681 = vmax.f32 %v1649, 0.0
        %v1682 = vmin.f32 %v1650, 6.0
        %v1683 = vmin.f32 %v1651, 6.0
        %v1684 = vmin.f32 %v1652, 6.0
        %v1685 = vmin.f32 %v1653, 6.0
        %v1686 = vmin.f32 %v1654, 6.0
        %v1687 = vmin.f32 %v1655, 6.0
        %v1688 = vmin.f32 %v1656, 6.0
        %v1689 = vmin.f32 %v1657, 6.0
        %v1690 = vmin.f32 %v1658, 6.0
        %v1691 = vmin.f32 %v1659, 6.0
        %v1692 = vmin.f32 %v1660, 6.0
        %v1693 = vmin.f32 %v1661, 6.0
        %v1694 = vmin.f32 %v1662, 6.0
        %v1695 = vmin.f32 %v1663, 6.0
        %v1696 = vmin.f32 %v1664, 6.0
        %v1697 = vmin.f32 %v1665, 6.0
        %v1698 = vmin.f32 %v1666, 6.0
        %v1699 = vmin.f32 %v1667, 6.0
        %v1700 = vmin.f32 %v1668, 6.0
        %v1701 = vmin.f32 %v1669, 6.0
        %v1702 = vmin.f32 %v1670, 6.0
        %v1703 = vmin.f32 %v1671, 6.0
        %v1704 = vmin.f32 %v1672, 6.0
        %v1705 = vmin.f32 %v1673, 6.0
        %v1706 = vmin.f32 %v1674, 6.0
        %v1707 = vmin.f32 %v1675, 6.0
        %v1708 = vmin.f32 %v1676, 6.0
        %v1709 = vmin.f32 %v1677, 6.0
        %v1710 = vmin.f32 %v1678, 6.0
        %v1711 = vmin.f32 %v1679, 6.0
        %v1712 = vmin.f32 %v1680, 6.0
        %v1713 = vmin.f32 %v1681, 6.0
        %v1714 = vmul.f32 %v1586, %v1682
        %v1715 = vmul.f32 %v1587, %v1683
        %v1716 = vmul.f32 %v1588, %v1684
        %v1717 = vmul.f32 %v1589, %v1685
        %v1718 = vmul.f32 %v1590, %v1686
        %v1719 = vmul.f32 %v1591, %v1687
        %v1720 = vmul.f32 %v1592, %v1688
        %v1721 = vmul.f32 %v1593, %v1689
        %v1722 = vmul.f32 %v1594, %v1690
        %v1723 = vmul.f32 %v1595, %v1691
        %v1724 = vmul.f32 %v1596, %v1692
        %v1725 = vmul.f32 %v1597, %v1693
        %v1726 = vmul.f32 %v1598, %v1694
        %v1727 = vmul.f32 %v1599, %v1695
        %v1728 = vmul.f32 %v1600, %v1696
        %v1729 = vmul.f32 %v1601, %v1697
        %v1730 = vmul.f32 %v1602, %v1698
        %v1731 = vmul.f32 %v1603, %v1699
        %v1732 = vmul.f32 %v1604, %v1700
        %v1733 = vmul.f32 %v1605, %v1701
        %v1734 = vmul.f32 %v1606, %v1702
        %v1735 = vmul.f32 %v1607, %v1703
        %v1736 = vmul.f32 %v1608, %v1704
        %v1737 = vmul.f32 %v1609, %v1705
        %v1738 = vmul.f32 %v1610, %v1706
        %v1739 = vmul.f32 %v1611, %v1707
        %v1740 = vmul.f32 %v1612, %v1708
        %v1741 = vmul.f32 %v1613, %v1709
        %v1742 = vmul.f32 %v1614, %v1710
        %v1743 = vmul.f32 %v1615, %v1711
        %v1744 = vmul.f32 %v1616, %v1712
        %v1745 = vmul.f32 %v1617, %v1713
        %v1746 = vmul.f32 %v1714, 0.16666667
        %v1747 = vmul.f32 %v1715, 0.16666667
        %v1748 = vmul.f32 %v1716, 0.16666667
        %v1749 = vmul.f32 %v1717, 0.16666667
        %v1750 = vmul.f32 %v1718, 0.16666667
        %v1751 = vmul.f32 %v1719, 0.16666667
        %v1752 = vmul.f32 %v1720, 0.16666667
        %v1753 = vmul.f32 %v1721, 0.16666667
        %v1754 = vmul.f32 %v1722, 0.16666667
        %v1755 = vmul.f32 %v1723, 0.16666667
        %v1756 = vmul.f32 %v1724, 0.16666667
        %v1757 = vmul.f32 %v1725, 0.16666667
        %v1758 = vmul.f32 %v1726, 0.16666667
        %v1759 = vmul.f32 %v1727, 0.16666667
        %v1760 = vmul.f32 %v1728, 0.16666667
        %v1761 = vmul.f32 %v1729, 0.16666667
        %v1762 = vmul.f32 %v1730, 0.16666667
        %v1763 = vmul.f32 %v1731, 0.16666667
        %v1764 = vmul.f32 %v1732, 0.16666667
        %v1765 = vmul.f32 %v1733, 0.16666667
        %v1766 = vmul.f32 %v1734, 0.16666667
        %v1767 = vmul.f32 %v1735, 0.16666667
        %v1768 = vmul.f32 %v1736, 0.16666667
        %v1769 = vmul.f32 %v1737, 0.16666667
        %v1770 = vmul.f32 %v1738, 0.16666667
        %v1771 = vmul.f32 %v1739, 0.16666667
        %v1772 = vmul.f32 %v1740, 0.16666667
        %v1773 = vmul.f32 %v1741, 0.16666667
        %v1774 = vmul.f32 %v1742, 0.16666667
        %v1775 = vmul.f32 %v1743, 0.16666667
        %v1776 = vmul.f32 %v1744, 0.16666667
        %v1777 = vmul.f32 %v1745, 0.16666667
        %1778 = vst [vmem:[%s242] sm:$0xff] %v1746
        %1779 = vst [vmem:[%s242 + $0x8] sm:$0xff] %v1747
        %1780 = vst [vmem:[%s242 + $0x10] sm:$0xff] %v1748
        %1781 = vst [vmem:[%s242 + $0x18] sm:$0xff] %v1749
        %1782 = vst [vmem:[%s242 + $0x20] sm:$0xff] %v1750
        %1783 = vst [vmem:[%s242 + $0x28] sm:$0xff] %v1751
        %1784 = vst [vmem:[%s242 + $0x30] sm:$0xff] %v1752
        %1785 = vst [vmem:[%s242 + $0x38] sm:$0xff] %v1753
        %1786 = vst [vmem:[%s242 + $0x40] sm:$0xff] %v1754
        %1787 = vst [vmem:[%s242 + $0x48] sm:$0xff] %v1755
        %1788 = vst [vmem:[%s242 + $0x50] sm:$0xff] %v1756
        %1789 = vst [vmem:[%s242 + $0x58] sm:$0xff] %v1757
        %1790 = vst [vmem:[%s242 + $0x60] sm:$0xff] %v1758
        %1791 = vst [vmem:[%s242 + $0x68] sm:$0xff] %v1759
        %1792 = vst [vmem:[%s242 + $0x70] sm:$0xff] %v1760
        %1793 = vst [vmem:[%s242 + $0x78] sm:$0xff] %v1761
        %1794 = vst [vmem:[%s242 + $0x80] sm:$0xff] %v1762
        %1795 = vst [vmem:[%s242 + $0x88] sm:$0xff] %v1763
        %1796 = vst [vmem:[%s242 + $0x90] sm:$0xff] %v1764
        %1797 = vst [vmem:[%s242 + $0x98] sm:$0xff] %v1765
        %1798 = vst [vmem:[%s242 + $0xa0] sm:$0xff] %v1766
        %1799 = vst [vmem:[%s242 + $0xa8] sm:$0xff] %v1767
        %1800 = vst [vmem:[%s242 + $0xb0] sm:$0xff] %v1768
        %1801 = vst [vmem:[%s242 + $0xb8] sm:$0xff] %v1769
        %1802 = vst [vmem:[%s242 + $0xc0] sm:$0xff] %v1770
        %1803 = vst [vmem:[%s242 + $0xc8] sm:$0xff] %v1771
        %1804 = vst [vmem:[%s242 + $0xd0] sm:$0xff] %v1772
        %1805 = vst [vmem:[%s242 + $0xd8] sm:$0xff] %v1773
        %1806 = vst [vmem:[%s242 + $0xe0] sm:$0xff] %v1774
        %1807 = vst [vmem:[%s242 + $0xe8] sm:$0xff] %v1775
        %1808 = vst [vmem:[%s242 + $0xf0] sm:$0xff] %v1776
        %1809 = vst [vmem:[%s242 + $0xf8] sm:$0xff] %v1777
        %s1810 = sand.u32 %s140, 1
        %s1811 = scalar_lea.sflag [#allocation5], %s1810
        %s1812 = sand.u32 %s140, 1
        %s1813 = smul.addr %s1812, 256
        %s1814 = scalar_lea.vmem [#allocation6], %s1813
        // Predicated region
        $region45: #{dwc_patch_embed.1} parent=39 // pred_check
          %p1815 = pneg %p150
        $region46: #{dwc_patch_embed.1} parent=39 // pred_check_branch
          %1817 = sbr.rel (%p1815) target = $region48
        $region47: #{dwc_patch_embed.1} parent=39 // pred_region
          %s1819 = ssub.s32 4096, 4096
          %1820 = vsyncadd %s1811, %s1819
          %s1821 = smul.addr %s22, 32
          %s1822 = smul.addr %s1821, 128
          %s1823 = scalar_lea.hbm %s5, %s1822
          %s1824 = sshll.u32 %s1814, 4
          %s1825 = int_to_ptr.vmem [resolvable:$true] %s1824
          %1830 = dma.vmem_to_hbm [thread:$0]  %s1825, 4096, %s1823, %s1811, 128, 128, 8
        $region48: #{dwc_patch_embed.1} parent=39 // pred_fallthru
          _
      $region40: #{dwc_patch_embed.1} parent=5 // pred_fallthru
        _
      %p1831 = scmp.le.s32.totalorder 2, %s17
      // Predicated region
      $region49: #{dwc_patch_embed.1} parent=5 // pred_check
        %p1832 = pneg %p1831
      $region50: #{dwc_patch_embed.1} parent=5 // pred_check_branch
        %1834 = sbr.rel (%p1832) target = $region52
      $region51: #{dwc_patch_embed.1} parent=5 // pred_region
        %s1835 = ssub.s32 %s17, 2
        // Predicated region
        $region53: #{dwc_patch_embed.1} parent=51 // pred_check
          %p1836 = pneg %p156
        $region54: #{dwc_patch_embed.1} parent=51 // pred_check_branch
          %1838 = sbr.rel (%p1836) target = $region56
        $region55: #{dwc_patch_embed.1} parent=51 // pred_region
          %s1839 = sand.u32 %s141, 1
          %s1840 = scalar_lea.sflag [#allocation5], %s1839
          %s1841 = sand.u32 %s141, 1
          %s1842 = smul.addr %s1841, 256
          %s1843 = scalar_lea.vmem [#allocation6], %s1842
          %1844 = dma.done %s1840, 4096
        $region56: #{dwc_patch_embed.1} parent=51 // pred_fallthru
          _
      $region52: #{dwc_patch_embed.1} parent=5 // pred_fallthru
        _
    $region6: #{dwc_patch_embed.1} parent=1 // loop_footer
      %s21 = sadd.s32 1, %s17
    $region7: #{dwc_patch_embed.1} parent=1 // loop_footer_branch
      %16 = sbr.rel target = $region3
    $region8: #{dwc_patch_embed.1} parent=1 // loop_exit
      _
    %1845 = vsyncpa [#allocation4], 1
    %s1846 = scalar_lea.sflag [#allocation4], 1
    %1847 = vsyncpa %s1846, 1
    %1848 = vsyncpa [#allocation5], 1
    %s1849 = scalar_lea.sflag [#allocation5], 1
    %1850 = vsyncpa %s1849, 1

</llo_original>
